<compile_context>
chip_gen: v6e
topology: v6e:2x2x1
jax: 0.10.0
libtpu: 0.0.40
codegen_flags: <defaults>
</compile_context>

<pallas_src>
import functools

import jax
import jax.numpy as jnp
from jax.experimental import pallas as pl
from jax.experimental.pallas import tpu as pltpu

D_SENT = 300                 # per-sentence feature dim (as in the PyTorch module)
NEG_SLOPE = 0.01             # nn.LeakyReLU default negative_slope


def _pre_pred_kernel(
    se_ref, sc_ref, sh_ref,                     # row tiles: sent_e, sent_c, share
    wes_ref, wesh_ref, be_ref, woe_ref,         # e-branch params (VMEM)
    wcs_ref, wcsh_ref, bc_ref, woc_ref,         # c-branch params (VMEM)
    head_b_ref,                                 # SMEM (1, 2): [b_oe, b_oc]
    pe_ref, pc_ref, he_ref, hc_ref,             # outputs
):
    # bf16 operands feed the MXU at full rate; accumulation stays f32.
    se = se_ref[...].astype(jnp.bfloat16)
    sc = sc_ref[...].astype(jnp.bfloat16)
    sh = sh_ref[...].astype(jnp.bfloat16)

    # ---- e branch: Linear(600->300) split as sent@W_top + share@W_bot ----
    he = (jnp.dot(se, wes_ref[...], preferred_element_type=jnp.float32)
          + jnp.dot(sh, wesh_ref[...], preferred_element_type=jnp.float32)
          + be_ref[...])
    he = jnp.where(he > 0, he, NEG_SLOPE * he)          # LeakyReLU (f32)
    he_ref[...] = he.astype(he_ref.dtype)               # bf16 writeback
    # Linear(300->1) as VPU multiply + lane reduction (avoids a nearly empty
    # MXU pass); stored lane-dense as a (1, tm) slab.  Head bias from SMEM.
    pe = jnp.sum(he * woe_ref[...], axis=-1)            # (tm,)
    pe_ref[...] = (pe[None, :] + head_b_ref[0, 0]).astype(pe_ref.dtype)

    # ---- c branch ----
    hc = (jnp.dot(sc, wcs_ref[...], preferred_element_type=jnp.float32)
          + jnp.dot(sh, wcsh_ref[...], preferred_element_type=jnp.float32)
          + bc_ref[...])
    hc = jnp.where(hc > 0, hc, NEG_SLOPE * hc)
    hc_ref[...] = hc.astype(hc_ref.dtype)
    pc = jnp.sum(hc * woc_ref[...], axis=-1)
    pc_ref[...] = (pc[None, :] + head_b_ref[0, 1]).astype(pc_ref.dtype)


def _choose_tm(n, tm_max):
    """Row-tile size.

    Must be a multiple of 128 (pred output block is (1, tm) over a (1, N)
    array) or equal to N.  For N > 256 we pick a multiple of 128 that gives at
    least two grid steps (lets ("parallel",) shard across v7x's 2 TensorCores)
    capped at tm_max; small N is handled as a single full-extent block.
    """
    if n <= 256:
        return n
    tm = 128 * pl.cdiv(pl.cdiv(n, 2), 128)
    return max(128, min(tm_max, tm))


@functools.partial(jax.jit, static_argnames=("tm_max", "subwork_dtype"))
def pre_predictions(sent_e, sent_c, share, params, *, tm_max=1024,
                    subwork_dtype=jnp.bfloat16):
    """Forward pass of Pre_Predictions.

    sent_e, sent_c, share: (B, S, 300) float32 (bf16 also accepted).
    Returns (pred_e (B,S) f32, pred_c (B,S) f32,
             sent_e_subwork (B,S,300), sent_c_subwork (B,S,300)),
    matching the PyTorch module's forward.  The subwork tensors are written in
    `subwork_dtype` (bf16 by default, per the HBM-byte analysis); pass
    jnp.float32 if strict f32 parity of those outputs is required downstream.
    """
    B, S, D = sent_e.shape
    assert D == D_SENT
    N = B * S

    se = sent_e.reshape(N, D)
    sc = sent_c.reshape(N, D)
    sh = share.reshape(N, D)

    (w_es, w_esh, b_e, w_oe, b_oe,
     w_cs, w_csh, b_c, w_oc, b_oc) = params
    # Pack the two scalar head biases into one tiny SMEM-resident array.
    head_b = jnp.concatenate([b_oe, b_oc], axis=1)       # (1, 2) f32

    tm = _choose_tm(N, tm_max)
    grid = (pl.cdiv(N, tm),)                              # ragged last block OK

    row_spec = pl.BlockSpec((tm, D_SENT), lambda i: (i, 0))

    def const_spec(shape):
        # Constant block index => DMA'd once, reused across all grid steps.
        return pl.BlockSpec(shape, lambda i: (0,) * len(shape))

    out_shapes = (
        jax.ShapeDtypeStruct((1, N), jnp.float32),        # pred_e (lane-dense)
        jax.ShapeDtypeStruct((1, N), jnp.float32),        # pred_c (lane-dense)
        jax.ShapeDtypeStruct((N, D_SENT), subwork_dtype),  # sent_e_subwork
        jax.ShapeDtypeStruct((N, D_SENT), subwork_dtype),  # sent_c_subwork
    )
    out_specs = [
        pl.BlockSpec((1, tm), lambda i: (0, i)),
        pl.BlockSpec((1, tm), lambda i: (0, i)),
        pl.BlockSpec((tm, D_SENT), lambda i: (i, 0)),
        pl.BlockSpec((tm, D_SENT), lambda i: (i, 0)),
    ]

    pe, pc, he, hc = pl.pallas_call(
        _pre_pred_kernel,
        out_shape=out_shapes,
        grid_spec=pltpu.PrefetchScalarGridSpec(
            num_scalar_prefetch=0,
            grid=grid,
            in_specs=[
                row_spec, row_spec, row_spec,
                const_spec((D_SENT, D_SENT)), const_spec((D_SENT, D_SENT)),
                const_spec((1, D_SENT)), const_spec((1, D_SENT)),
                const_spec((D_SENT, D_SENT)), const_spec((D_SENT, D_SENT)),
                const_spec((1, D_SENT)), const_spec((1, D_SENT)),
                pl.BlockSpec(memory_space=pltpu.MemorySpace.SMEM),
            ],
            out_specs=out_specs,
        ),
        compiler_params=pltpu.CompilerParams(
            dimension_semantics=("parallel",),
            # ~14 MiB double-buffered at tm=1024 (with 300->384 lane padding);
            # 40 MiB is safe on every generation (v7x: 64 MiB physical) and
            # lifts v5e's 16 MiB scoped default.
            vmem_limit_bytes=40 * 1024 * 1024,
        ),
    )(se, sc, sh,
      w_es, w_esh, b_e, w_oe,
      w_cs, w_csh, b_c, w_oc,
      head_b)

    pred_e = pe.reshape(B, S)                 # squeeze(2) of the PyTorch module
    pred_c = pc.reshape(B, S)
    sent_e_sub = he.reshape(B, S, D_SENT)
    sent_c_sub = hc.reshape(B, S, D_SENT)
    return pred_e, pred_c, sent_e_sub, sent_c_sub


def init_params(key):
    """Deterministic parameter init mirroring the PyTorch module's shapes.

    nn.Linear stores weight as (out, in).  We keep weights transposed to
    (in, out) and split the 600-row input axis into a sent half (top) and a
    share half (bottom) so the kernel never needs the concatenated input.
    Matmul weights are stored in bf16 (MXU operands); biases and the 300->1
    head rows stay f32 (VPU path).  Orthogonal init (gain=1) for weights,
    uniform(-1/sqrt(fan_in), 1/sqrt(fan_in)) for biases (PyTorch default).
    """
    keys = jax.random.split(key, 8)
    orth = jax.nn.initializers.orthogonal(scale=1.0)

    def bias(k, fan_in, size):
        bound = 1.0 / jnp.sqrt(fan_in)
        return jax.random.uniform(k, (1, size), jnp.float32, -bound, bound)

    # line_e: Linear(600, 300)
    w_e = orth(keys[0], (D_SENT, 2 * D_SENT), jnp.float32).T     # (600, 300)
    w_es = w_e[:D_SENT].astype(jnp.bfloat16)                     # sent half
    w_esh = w_e[D_SENT:].astype(jnp.bfloat16)                    # share half
    b_e = bias(keys[1], 2 * D_SENT, D_SENT)                      # (1, 300)

    # out_e_subwork: Linear(300, 1) kept as an f32 row vector.
    w_oe = orth(keys[2], (1, D_SENT), jnp.float32)               # (1, 300)
    b_oe = bias(keys[3], D_SENT, 1)                              # (1, 1)

    # line_c: Linear(600, 300)
    w_c = orth(keys[4], (D_SENT, 2 * D_SENT), jnp.float32).T
    w_cs = w_c[:D_SENT].astype(jnp.bfloat16)
    w_csh = w_c[D_SENT:].astype(jnp.bfloat16)
    b_c = bias(keys[5], 2 * D_SENT, D_SENT)

    # out_c_subwork: Linear(300, 1)
    w_oc = orth(keys[6], (1, D_SENT), jnp.float32)
    b_oc = bias(keys[7], D_SENT, 1)

    return (w_es, w_esh, b_e, w_oe, b_oe, w_cs, w_csh, b_c, w_oc, b_oc)


def _reference_bf16(sent_e, sent_c, share, params, subwork_dtype=jnp.bfloat16):
    """Plain-JAX reference matching the kernel's numerics (bf16 MXU, f32 acc)."""
    (w_es, w_esh, b_e, w_oe, b_oe, w_cs, w_csh, b_c, w_oc, b_oc) = params
    se = sent_e.astype(jnp.bfloat16)
    sc = sent_c.astype(jnp.bfloat16)
    sh = share.astype(jnp.bfloat16)
    he = (jnp.dot(se, w_es, preferred_element_type=jnp.float32)
          + jnp.dot(sh, w_esh, preferred_element_type=jnp.float32) + b_e)
    he = jnp.where(he > 0, he, NEG_SLOPE * he)
    hc = (jnp.dot(sc, w_cs, preferred_element_type=jnp.float32)
          + jnp.dot(sh, w_csh, preferred_element_type=jnp.float32) + b_c)
    hc = jnp.where(hc > 0, hc, NEG_SLOPE * hc)
    pe = jnp.sum(he * w_oe, axis=-1) + b_oe[0, 0]
    pc = jnp.sum(hc * w_oc, axis=-1) + b_oc[0, 0]
    return pe, pc, he.astype(subwork_dtype), hc.astype(subwork_dtype)


def _reference_f32(sent_e, sent_c, share, params):
    """Full-f32 reference of the PyTorch forward (module semantics)."""
    (w_es, w_esh, b_e, w_oe, b_oe, w_cs, w_csh, b_c, w_oc, b_oc) = params
    w_es = w_es.astype(jnp.float32)
    w_esh = w_esh.astype(jnp.float32)
    w_cs = w_cs.astype(jnp.float32)
    w_csh = w_csh.astype(jnp.float32)
    he = sent_e @ w_es + share @ w_esh + b_e
    he = jnp.where(he > 0, he, NEG_SLOPE * he)
    hc = sent_c @ w_cs + share @ w_csh + b_c
    hc = jnp.where(hc > 0, hc, NEG_SLOPE * hc)
    pe = jnp.sum(he * w_oe, axis=-1) + b_oe[0, 0]
    pc = jnp.sum(hc * w_oc, axis=-1) + b_oc[0, 0]
    return pe, pc, he, hc


def _check(outs, refs, atols, rtols, tag):
    names = ("pred_e", "pred_c", "sent_e_subwork", "sent_c_subwork")
    for name, o, r, at, rt in zip(names, outs, refs, atols, rtols):
        assert o.shape == r.shape, (name, o.shape, r.shape)
        ok = jnp.allclose(o.astype(jnp.float32), r.astype(jnp.float32),
                          atol=at, rtol=rt)
        assert ok, f"{tag}: mismatch in {name}"


if __name__ == "__main__":
    key = jax.random.PRNGKey(0)
    k_p = jax.random.fold_in(key, 0)
    params = init_params(k_p)

    # Primary small case (B=2, S=8) plus a ragged multi-tile case (N=400,
    # tm=256 -> 2 grid steps, masked partial last block).
    for case_idx, (B, S) in enumerate([(2, 8), (4, 100)]):
        k_e, k_c, k_s = jax.random.split(jax.random.fold_in(key, case_idx + 1), 3)
        sent_e = jax.random.normal(k_e, (B, S, D_SENT), jnp.float32)
        sent_c = jax.random.normal(k_c, (B, S, D_SENT), jnp.float32)
        share = jax.random.normal(k_s, (B, S, D_SENT), jnp.float32)

        outs = pre_predictions(sent_e, sent_c, share, params)
        outs = jax.block_until_ready(outs)

        refs_bf16 = _reference_bf16(sent_e, sent_c, share, params)
        refs_f32 = _reference_f32(sent_e, sent_c, share, params)

        # Tight check vs a reference using identical bf16-MXU / f32-acc
        # numerics (subwork outputs also bf16-rounded in the reference).
        _check(outs, refs_bf16,
               atols=(2e-3, 2e-3, 2e-2, 2e-2),
               rtols=(2e-3, 2e-3, 2e-2, 2e-2),
               tag=f"bf16-ref case{case_idx}")
        # Looser sanity check vs exact-f32 module semantics (bf16 rounding).
        _check(outs, refs_f32,
               atols=(8e-2,) * 4, rtols=(8e-2,) * 4,
               tag=f"f32-ref case{case_idx}")

    print("KERNEL_OK")
</pallas_src>

<mosaic_0001>
module attributes {stable_mosaic.version = 11 : i64} {
  func.func @_pre_pred_kernel(%arg0: i32, %arg1: memref<16x300xf32, #tpu.memory_space<vmem>>, %arg2: memref<16x300xf32, #tpu.memory_space<vmem>>, %arg3: memref<16x300xf32, #tpu.memory_space<vmem>>, %arg4: memref<300x300xbf16, #tpu.memory_space<vmem>>, %arg5: memref<300x300xbf16, #tpu.memory_space<vmem>>, %arg6: memref<1x300xf32, #tpu.memory_space<vmem>>, %arg7: memref<1x300xf32, #tpu.memory_space<vmem>>, %arg8: memref<300x300xbf16, #tpu.memory_space<vmem>>, %arg9: memref<300x300xbf16, #tpu.memory_space<vmem>>, %arg10: memref<1x300xf32, #tpu.memory_space<vmem>>, %arg11: memref<1x300xf32, #tpu.memory_space<vmem>>, %arg12: memref<1x2xf32, #tpu.memory_space<smem>>, %arg13: memref<1x16xf32, #tpu.memory_space<vmem>>, %arg14: memref<1x16xf32, #tpu.memory_space<vmem>>, %arg15: memref<16x300xbf16, #tpu.memory_space<vmem>>, %arg16: memref<16x300xbf16, #tpu.memory_space<vmem>>) attributes {dimension_semantics = [#tpu.dimension_semantics<parallel>], iteration_bounds = array<i64: 1>, scalar_prefetch = 0 : i64, scratch_operands = 0 : i64, tpu.core_type = #tpu.core_type<tc>, window_params = [{transform_indices = @transform_0, window_bounds = array<i64: 16, 300>}, {transform_indices = @transform_1, window_bounds = array<i64: 16, 300>}, {transform_indices = @transform_2, window_bounds = array<i64: 16, 300>}, {pipeline_mode = #tpu.pipeline_mode<synchronous>, transform_indices = @transform_3, window_bounds = array<i64: 300, 300>}, {pipeline_mode = #tpu.pipeline_mode<synchronous>, transform_indices = @transform_4, window_bounds = array<i64: 300, 300>}, {pipeline_mode = #tpu.pipeline_mode<synchronous>, transform_indices = @transform_5, window_bounds = array<i64: 1, 300>}, {pipeline_mode = #tpu.pipeline_mode<synchronous>, transform_indices = @transform_6, window_bounds = array<i64: 1, 300>}, {pipeline_mode = #tpu.pipeline_mode<synchronous>, transform_indices = @transform_7, window_bounds = array<i64: 300, 300>}, {pipeline_mode = #tpu.pipeline_mode<synchronous>, transform_indices = @transform_8, window_bounds = array<i64: 300, 300>}, {pipeline_mode = #tpu.pipeline_mode<synchronous>, transform_indices = @transform_9, window_bounds = array<i64: 1, 300>}, {pipeline_mode = #tpu.pipeline_mode<synchronous>, transform_indices = @transform_10, window_bounds = array<i64: 1, 300>}, {transform_indices = @transform_11, window_bounds = array<i64: 1, 2>}, {transform_indices = @transform_12, window_bounds = array<i64: 1, 16>}, {transform_indices = @transform_13, window_bounds = array<i64: 1, 16>}, {transform_indices = @transform_14, window_bounds = array<i64: 16, 300>}, {transform_indices = @transform_15, window_bounds = array<i64: 16, 300>}]} {
    %c0 = arith.constant 0 : index
    %c0_0 = arith.constant 0 : index
    %0 = vector.load %arg1[%c0, %c0_0] : memref<16x300xf32, #tpu.memory_space<vmem>>, vector<16x300xf32>
    %1 = arith.truncf %0 : vector<16x300xf32> to vector<16x300xbf16>
    %c0_1 = arith.constant 0 : index
    %c0_2 = arith.constant 0 : index
    %2 = vector.load %arg2[%c0_1, %c0_2] : memref<16x300xf32, #tpu.memory_space<vmem>>, vector<16x300xf32>
    %3 = arith.truncf %2 : vector<16x300xf32> to vector<16x300xbf16>
    %c0_3 = arith.constant 0 : index
    %c0_4 = arith.constant 0 : index
    %4 = vector.load %arg3[%c0_3, %c0_4] : memref<16x300xf32, #tpu.memory_space<vmem>>, vector<16x300xf32>
    %5 = arith.truncf %4 : vector<16x300xf32> to vector<16x300xbf16>
    %c0_5 = arith.constant 0 : index
    %c0_6 = arith.constant 0 : index
    %6 = vector.load %arg4[%c0_5, %c0_6] : memref<300x300xbf16, #tpu.memory_space<vmem>>, vector<300x300xbf16>
    %cst = arith.constant dense<0.000000e+00> : vector<16x300xf32>
    %7 = tpu.matmul %1, %6, %cst {dimension_numbers = #tpu.dot_dimension_numbers<[1], [0], [0], [1], [0, 0, 1, 1], [], []>} : vector<16x300xbf16>, vector<300x300xbf16>, vector<16x300xf32> -> vector<16x300xf32>
    %c0_7 = arith.constant 0 : index
    %c0_8 = arith.constant 0 : index
    %8 = vector.load %arg5[%c0_7, %c0_8] : memref<300x300xbf16, #tpu.memory_space<vmem>>, vector<300x300xbf16>
    %cst_9 = arith.constant dense<0.000000e+00> : vector<16x300xf32>
    %9 = tpu.matmul %5, %8, %cst_9 {dimension_numbers = #tpu.dot_dimension_numbers<[1], [0], [0], [1], [0, 0, 1, 1], [], []>} : vector<16x300xbf16>, vector<300x300xbf16>, vector<16x300xf32> -> vector<16x300xf32>
    %10 = arith.addf %7, %9 : vector<16x300xf32>
    %c0_10 = arith.constant 0 : index
    %c0_11 = arith.constant 0 : index
    %11 = vector.load %arg6[%c0_10, %c0_11] : memref<1x300xf32, #tpu.memory_space<vmem>>, vector<1x300xf32>
    %12 = vector.broadcast %11 : vector<1x300xf32> to vector<16x300xf32>
    %13 = arith.addf %10, %12 : vector<16x300xf32>
    %cst_12 = arith.constant 0.000000e+00 : f32
    %14 = vector.broadcast %cst_12 : f32 to vector<16x300xf32>
    %15 = arith.cmpf ogt, %13, %14 : vector<16x300xf32>
    %cst_13 = arith.constant 0.00999999977 : f32
    %16 = vector.broadcast %cst_13 : f32 to vector<16x300xf32>
    %17 = arith.mulf %16, %13 : vector<16x300xf32>
    %18 = arith.select %15, %13, %17 : vector<16x300xi1>, vector<16x300xf32>
    %19 = arith.truncf %18 : vector<16x300xf32> to vector<16x300xbf16>
    %c0_14 = arith.constant 0 : index
    %c0_15 = arith.constant 0 : index
    %20 = vector.load %arg15[%c0_14, %c0_15] : memref<16x300xbf16, #tpu.memory_space<vmem>>, vector<16x300xbf16>
    tpu.vector_store %arg15[%c0_14, %c0_15], %19 {strides = array<i32>} : memref<16x300xbf16, #tpu.memory_space<vmem>>, vector<16x300xbf16>,
    %c0_16 = arith.constant 0 : index
    %c0_17 = arith.constant 0 : index
    %21 = vector.load %arg7[%c0_16, %c0_17] : memref<1x300xf32, #tpu.memory_space<vmem>>, vector<1x300xf32>
    %22 = vector.broadcast %21 : vector<1x300xf32> to vector<16x300xf32>
    %23 = arith.mulf %18, %22 : vector<16x300xf32>
    %cst_18 = arith.constant dense<0.000000e+00> : vector<16xf32>
    %24 = vector.multi_reduction <add>, %23, %cst_18 [1] : vector<16x300xf32> to vector<16xf32>
    %25 = vector.shape_cast %24 : vector<16xf32> to vector<1x16xf32>
    %c0_19 = arith.constant 0 : index
    %c0_20 = arith.constant 0 : index
    %26 = memref.load %arg12[%c0_19, %c0_20] : memref<1x2xf32, #tpu.memory_space<smem>>
    %27 = vector.broadcast %26 : f32 to vector<1x16xf32>
    %28 = arith.addf %25, %27 : vector<1x16xf32>
    %c0_21 = arith.constant 0 : index
    %c0_22 = arith.constant 0 : index
    %29 = vector.load %arg13[%c0_21, %c0_22] : memref<1x16xf32, #tpu.memory_space<vmem>>, vector<1x16xf32>
    tpu.vector_store %arg13[%c0_21, %c0_22], %28 {strides = array<i32>} : memref<1x16xf32, #tpu.memory_space<vmem>>, vector<1x16xf32>,
    %c0_23 = arith.constant 0 : index
    %c0_24 = arith.constant 0 : index
    %30 = vector.load %arg8[%c0_23, %c0_24] : memref<300x300xbf16, #tpu.memory_space<vmem>>, vector<300x300xbf16>
    %cst_25 = arith.constant dense<0.000000e+00> : vector<16x300xf32>
    %31 = tpu.matmul %3, %30, %cst_25 {dimension_numbers = #tpu.dot_dimension_numbers<[1], [0], [0], [1], [0, 0, 1, 1], [], []>} : vector<16x300xbf16>, vector<300x300xbf16>, vector<16x300xf32> -> vector<16x300xf32>
    %c0_26 = arith.constant 0 : index
    %c0_27 = arith.constant 0 : index
    %32 = vector.load %arg9[%c0_26, %c0_27] : memref<300x300xbf16, #tpu.memory_space<vmem>>, vector<300x300xbf16>
    %cst_28 = arith.constant dense<0.000000e+00> : vector<16x300xf32>
    %33 = tpu.matmul %5, %32, %cst_28 {dimension_numbers = #tpu.dot_dimension_numbers<[1], [0], [0], [1], [0, 0, 1, 1], [], []>} : vector<16x300xbf16>, vector<300x300xbf16>, vector<16x300xf32> -> vector<16x300xf32>
    %34 = arith.addf %31, %33 : vector<16x300xf32>
    %c0_29 = arith.constant 0 : index
    %c0_30 = arith.constant 0 : index
    %35 = vector.load %arg10[%c0_29, %c0_30] : memref<1x300xf32, #tpu.memory_space<vmem>>, vector<1x300xf32>
    %36 = vector.broadcast %35 : vector<1x300xf32> to vector<16x300xf32>
    %37 = arith.addf %34, %36 : vector<16x300xf32>
    %cst_31 = arith.constant 0.000000e+00 : f32
    %38 = vector.broadcast %cst_31 : f32 to vector<16x300xf32>
    %39 = arith.cmpf ogt, %37, %38 : vector<16x300xf32>
    %cst_32 = arith.constant 0.00999999977 : f32
    %40 = vector.broadcast %cst_32 : f32 to vector<16x300xf32>
    %41 = arith.mulf %40, %37 : vector<16x300xf32>
    %42 = arith.select %39, %37, %41 : vector<16x300xi1>, vector<16x300xf32>
    %43 = arith.truncf %42 : vector<16x300xf32> to vector<16x300xbf16>
    %c0_33 = arith.constant 0 : index
    %c0_34 = arith.constant 0 : index
    %44 = vector.load %arg16[%c0_33, %c0_34] : memref<16x300xbf16, #tpu.memory_space<vmem>>, vector<16x300xbf16>
    tpu.vector_store %arg16[%c0_33, %c0_34], %43 {strides = array<i32>} : memref<16x300xbf16, #tpu.memory_space<vmem>>, vector<16x300xbf16>,
    %c0_35 = arith.constant 0 : index
    %c0_36 = arith.constant 0 : index
    %45 = vector.load %arg11[%c0_35, %c0_36] : memref<1x300xf32, #tpu.memory_space<vmem>>, vector<1x300xf32>
    %46 = vector.broadcast %45 : vector<1x300xf32> to vector<16x300xf32>
    %47 = arith.mulf %42, %46 : vector<16x300xf32>
    %cst_37 = arith.constant dense<0.000000e+00> : vector<16xf32>
    %48 = vector.multi_reduction <add>, %47, %cst_37 [1] : vector<16x300xf32> to vector<16xf32>
    %49 = vector.shape_cast %48 : vector<16xf32> to vector<1x16xf32>
    %c0_38 = arith.constant 0 : index
    %c1 = arith.constant 1 : index
    %50 = memref.load %arg12[%c0_38, %c1] : memref<1x2xf32, #tpu.memory_space<smem>>
    %51 = vector.broadcast %50 : f32 to vector<1x16xf32>
    %52 = arith.addf %49, %51 : vector<1x16xf32>
    %c0_39 = arith.constant 0 : index
    %c0_40 = arith.constant 0 : index
    %53 = vector.load %arg14[%c0_39, %c0_40] : memref<1x16xf32, #tpu.memory_space<vmem>>, vector<1x16xf32>
    tpu.vector_store %arg14[%c0_39, %c0_40], %52 {strides = array<i32>} : memref<1x16xf32, #tpu.memory_space<vmem>>, vector<1x16xf32>,
    return
  }
  func.func @transform_0(%arg0: i32) -> (i32, i32) {
    %c0_i32 = arith.constant 0 : i32
    %c0_i32_0 = arith.constant 0 : i32
    return %arg0, %c0_i32 : i32, i32
  }
  func.func @transform_1(%arg0: i32) -> (i32, i32) {
    %c0_i32 = arith.constant 0 : i32
    %c0_i32_0 = arith.constant 0 : i32
    return %arg0, %c0_i32 : i32, i32
  }
  func.func @transform_2(%arg0: i32) -> (i32, i32) {
    %c0_i32 = arith.constant 0 : i32
    %c0_i32_0 = arith.constant 0 : i32
    return %arg0, %c0_i32 : i32, i32
  }
  func.func @transform_3(%arg0: i32) -> (i32, i32) {
    %c0_i32 = arith.constant 0 : i32
    %c0_i32_0 = arith.constant 0 : i32
    %c0_i32_1 = arith.constant 0 : i32
    return %c0_i32, %c0_i32_0 : i32, i32
  }
  func.func @transform_4(%arg0: i32) -> (i32, i32) {
    %c0_i32 = arith.constant 0 : i32
    %c0_i32_0 = arith.constant 0 : i32
    %c0_i32_1 = arith.constant 0 : i32
    return %c0_i32, %c0_i32_0 : i32, i32
  }
  func.func @transform_5(%arg0: i32) -> (i32, i32) {
    %c0_i32 = arith.constant 0 : i32
    %c0_i32_0 = arith.constant 0 : i32
    %c0_i32_1 = arith.constant 0 : i32
    return %c0_i32, %c0_i32_0 : i32, i32
  }
  func.func @transform_6(%arg0: i32) -> (i32, i32) {
    %c0_i32 = arith.constant 0 : i32
    %c0_i32_0 = arith.constant 0 : i32
    %c0_i32_1 = arith.constant 0 : i32
    return %c0_i32, %c0_i32_0 : i32, i32
  }
  func.func @transform_7(%arg0: i32) -> (i32, i32) {
    %c0_i32 = arith.constant 0 : i32
    %c0_i32_0 = arith.constant 0 : i32
    %c0_i32_1 = arith.constant 0 : i32
    return %c0_i32, %c0_i32_0 : i32, i32
  }
  func.func @transform_8(%arg0: i32) -> (i32, i32) {
    %c0_i32 = arith.constant 0 : i32
    %c0_i32_0 = arith.constant 0 : i32
    %c0_i32_1 = arith.constant 0 : i32
    return %c0_i32, %c0_i32_0 : i32, i32
  }
  func.func @transform_9(%arg0: i32) -> (i32, i32) {
    %c0_i32 = arith.constant 0 : i32
    %c0_i32_0 = arith.constant 0 : i32
    %c0_i32_1 = arith.constant 0 : i32
    return %c0_i32, %c0_i32_0 : i32, i32
  }
  func.func @transform_10(%arg0: i32) -> (i32, i32) {
    %c0_i32 = arith.constant 0 : i32
    %c0_i32_0 = arith.constant 0 : i32
    %c0_i32_1 = arith.constant 0 : i32
    return %c0_i32, %c0_i32_0 : i32, i32
  }
  func.func @transform_11(%arg0: i32) -> (i32, i32) {
    %c0_i32 = arith.constant 0 : i32
    %c0_i32_0 = arith.constant 0 : i32
    %c0_i32_1 = arith.constant 0 : i32
    return %c0_i32, %c0_i32_0 : i32, i32
  }
  func.func @transform_12(%arg0: i32) -> (i32, i32) {
    %c0_i32 = arith.constant 0 : i32
    %c0_i32_0 = arith.constant 0 : i32
    return %c0_i32, %arg0 : i32, i32
  }
  func.func @transform_13(%arg0: i32) -> (i32, i32) {
    %c0_i32 = arith.constant 0 : i32
    %c0_i32_0 = arith.constant 0 : i32
    return %c0_i32, %arg0 : i32, i32
  }
  func.func @transform_14(%arg0: i32) -> (i32, i32) {
    %c0_i32 = arith.constant 0 : i32
    %c0_i32_0 = arith.constant 0 : i32
    return %arg0, %c0_i32 : i32, i32
  }
  func.func @transform_15(%arg0: i32) -> (i32, i32) {
    %c0_i32 = arith.constant 0 : i32
    %c0_i32_0 = arith.constant 0 : i32
    return %arg0, %c0_i32 : i32, i32
  }
}

</mosaic_0001>

<llo_original>
// kernel: pre_predictions.1
$region0: #{pre_predictions.1}
  #allocation0 [shape = 'u32[]', space=smem, size = 0x4, offset = 0x4, fixed_abs, tag = 'smem constant byte address 0x4 - core index']
  #allocation1 [shape = 'u32[144,128]{1,0:T(1,128)}', space=vmem, size = 0x12000, scoped, tag = 'internal scratch']
  %s0 = inlined_call_operand.hbm [shape: f32[16,300], index: 0, kind: input, shape index: {}]
  %s1 = inlined_call_operand.hbm [shape: f32[16,300], index: 1, kind: input, shape index: {}]
  %s2 = inlined_call_operand.hbm [shape: f32[16,300], index: 2, kind: input, shape index: {}]
  %s3 = inlined_call_operand.hbm [shape: bf16[300,300], index: 3, kind: input, shape index: {}]
  %s4 = inlined_call_operand.hbm [shape: bf16[300,300], index: 4, kind: input, shape index: {}]
  %s5 = inlined_call_operand.vmem [shape: f32[1,300], index: 5, kind: input, shape index: {}]
  %s6 = inlined_call_operand.vmem [shape: f32[1,300], index: 6, kind: input, shape index: {}]
  %s7 = inlined_call_operand.hbm [shape: bf16[300,300], index: 7, kind: input, shape index: {}]
  %s8 = inlined_call_operand.hbm [shape: bf16[300,300], index: 8, kind: input, shape index: {}]
  %s9 = inlined_call_operand.vmem [shape: f32[1,300], index: 9, kind: input, shape index: {}]
  %s10 = inlined_call_operand.vmem [shape: f32[1,300], index: 10, kind: input, shape index: {}]
  %s11 = inlined_call_operand.vmem [shape: f32[1,2], index: 11, kind: input, shape index: {}]
  %s12 = inlined_call_operand.vmem [shape: f32[1,16], index: 12, kind: output, shape index: {0}]
  %s13 = inlined_call_operand.vmem [shape: f32[1,16], index: 13, kind: output, shape index: {1}]
  %s14 = inlined_call_operand.hbm [shape: bf16[16,300], index: 14, kind: output, shape index: {2}]
  %s15 = inlined_call_operand.hbm [shape: bf16[16,300], index: 15, kind: output, shape index: {3}]
  %16 = xla_tuple %s12, %s13, %s14, %s15
  %s17 = sld [smem:[#allocation0]]
  $region114: #{pre_predictions.1} parent=0
    _
  %s19 = ssub.s32 1, %s17
  %s20 = scalar_select 0, %s19, %s17
  $region1: #{pre_predictions.1} parent=0
    #allocation2 [shape = 'u8[24576]{0}', space=vmem, size = 0x6000, scoped, tag = 'input window, operand 0, single buffered']
    #allocation3 [shape = 's32[1]{0}', space=sflag, size = 0x4, scoped, tag = 'scoped memory for pre_predictions.1']
    #allocation4 [shape = 's32[1]{0}', space=sflag, size = 0x4, scoped, tag = 'scoped memory for pre_predictions.1']
    #allocation5 [shape = 's32[1]{0}', space=sflag, size = 0x4, scoped, tag = 'scoped memory for pre_predictions.1']
    #allocation6 [shape = 'u8[24576]{0}', space=vmem, size = 0x6000, scoped, tag = 'input window, operand 1, single buffered']
    #allocation7 [shape = 's32[1]{0}', space=sflag, size = 0x4, scoped, tag = 'scoped memory for pre_predictions.1']
    #allocation8 [shape = 'u8[24576]{0}', space=vmem, size = 0x6000, scoped, tag = 'input window, operand 2, single buffered']
    #allocation9 [shape = 'u8[233472]{0}', space=vmem, size = 0x39000, scoped, tag = 'input window, operand 3, single buffered']
    #allocation10 [shape = 's32[1]{0}', space=sflag, size = 0x4, scoped, tag = 'scoped memory for pre_predictions.1']
    #allocation11 [shape = 'u8[233472]{0}', space=vmem, size = 0x39000, scoped, tag = 'input window, operand 4, single buffered']
    #allocation12 [shape = 'u8[233472]{0}', space=vmem, size = 0x39000, scoped, tag = 'input window, operand 7, single buffered']
    #allocation13 [shape = 's32[1]{0}', space=sflag, size = 0x4, scoped, tag = 'scoped memory for pre_predictions.1']
    #allocation14 [shape = 'u8[233472]{0}', space=vmem, size = 0x39000, scoped, tag = 'input window, operand 8, single buffered']
    #allocation15 [shape = 'u8[512]{0}', space=smem, size = 0x200, scoped, tag = 'input window, operand 11, single buffered']
    #allocation16 [shape = 'u8[12288]{0}', space=vmem, size = 0x3000, scoped, tag = 'output window, operand 2, single buffered']
    #allocation17 [shape = 'u8[12288]{0}', space=vmem, size = 0x3000, scoped, tag = 'output window, operand 3, single buffered']
    #allocation18 [shape = 's32[1]{0}', space=sflag, size = 0x4, scoped, tag = 'scoped memory for pre_predictions.1']
    %21 = vsyncpa [#allocation3], 0
    %22 = vsyncpa [#allocation7], 0
    %23 = vsyncpa [#allocation10], 0
    %24 = vsyncpa [#allocation13], 0
    %25 = vsyncpa [#allocation5], 0
    %26 = vsyncpa [#allocation4], 0
    %27 = vsyncpa [#allocation18], 0
    // Predicated region
    $region2: #{pre_predictions.1} parent=1 // pred_check
      _
    $region3: #{pre_predictions.1} parent=1 // pred_check_branch
      %29 = sbr.rel (0) target = $region5
    $region4: #{pre_predictions.1} parent=1 // pred_region
      %s31 = ssub.s32 768, 768
      %32 = vsyncadd [#allocation3], %s31
      %s33 = sshll.u32 [#allocation2], 4
      %s34 = int_to_ptr.vmem [resolvable:$true] %s33
      %39 = dma.hbm_to_vmem [thread:$0]  %s0, 768, %s34, [#allocation3], 384, 384, 24
    $region5: #{pre_predictions.1} parent=1 // pred_fallthru
      _
    // Predicated region
    $region6: #{pre_predictions.1} parent=1 // pred_check
      _
    $region7: #{pre_predictions.1} parent=1 // pred_check_branch
      %41 = sbr.rel (0) target = $region9
    $region8: #{pre_predictions.1} parent=1 // pred_region
      %s43 = ssub.s32 768, 768
      %44 = vsyncadd [#allocation7], %s43
      %s45 = sshll.u32 [#allocation6], 4
      %s46 = int_to_ptr.vmem [resolvable:$true] %s45
      %51 = dma.hbm_to_vmem [thread:$0]  %s1, 768, %s46, [#allocation7], 384, 384, 24
    $region9: #{pre_predictions.1} parent=1 // pred_fallthru
      _
    // Predicated region
    $region10: #{pre_predictions.1} parent=1 // pred_check
      _
    $region11: #{pre_predictions.1} parent=1 // pred_check_branch
      %53 = sbr.rel (0) target = $region13
    $region12: #{pre_predictions.1} parent=1 // pred_region
      %s55 = ssub.s32 768, 768
      %56 = vsyncadd [#allocation7], %s55
      %s57 = sshll.u32 [#allocation8], 4
      %s58 = int_to_ptr.vmem [resolvable:$true] %s57
      %63 = dma.hbm_to_vmem [thread:$0]  %s2, 768, %s58, [#allocation7], 384, 384, 24
    $region13: #{pre_predictions.1} parent=1 // pred_fallthru
      _
    // Predicated region
    $region14: #{pre_predictions.1} parent=1 // pred_check
      _
    $region15: #{pre_predictions.1} parent=1 // pred_check_branch
      %65 = sbr.rel (0) target = $region17
    $region16: #{pre_predictions.1} parent=1 // pred_region
      %s67 = ssub.s32 7296, 7296
      %68 = vsyncadd [#allocation10], %s67
      %s69 = sshll.u32 [#allocation9], 4
      %s70 = int_to_ptr.vmem [resolvable:$true] %s69
      %75 = dma.hbm_to_vmem [thread:$0]  %s3, 7296, %s70, [#allocation10], 192, 192, 12
    $region17: #{pre_predictions.1} parent=1 // pred_fallthru
      _
    // Predicated region
    $region18: #{pre_predictions.1} parent=1 // pred_check
      _
    $region19: #{pre_predictions.1} parent=1 // pred_check_branch
      %77 = sbr.rel (0) target = $region21
    $region20: #{pre_predictions.1} parent=1 // pred_region
      %s79 = ssub.s32 7296, 7296
      %80 = vsyncadd [#allocation10], %s79
      %s81 = sshll.u32 [#allocation11], 4
      %s82 = int_to_ptr.vmem [resolvable:$true] %s81
      %87 = dma.hbm_to_vmem [thread:$0]  %s4, 7296, %s82, [#allocation10], 192, 192, 12
    $region21: #{pre_predictions.1} parent=1 // pred_fallthru
      _
    // Predicated region
    $region22: #{pre_predictions.1} parent=1 // pred_check
      _
    $region23: #{pre_predictions.1} parent=1 // pred_check_branch
      %89 = sbr.rel (0) target = $region25
    $region24: #{pre_predictions.1} parent=1 // pred_region
      _
    $region25: #{pre_predictions.1} parent=1 // pred_fallthru
      _
    // Predicated region
    $region26: #{pre_predictions.1} parent=1 // pred_check
      _
    $region27: #{pre_predictions.1} parent=1 // pred_check_branch
      %91 = sbr.rel (0) target = $region29
    $region28: #{pre_predictions.1} parent=1 // pred_region
      _
    $region29: #{pre_predictions.1} parent=1 // pred_fallthru
      _
    // Predicated region
    $region30: #{pre_predictions.1} parent=1 // pred_check
      _
    $region31: #{pre_predictions.1} parent=1 // pred_check_branch
      %93 = sbr.rel (0) target = $region33
    $region32: #{pre_predictions.1} parent=1 // pred_region
      %s95 = ssub.s32 7296, 7296
      %96 = vsyncadd [#allocation13], %s95
      %s97 = sshll.u32 [#allocation12], 4
      %s98 = int_to_ptr.vmem [resolvable:$true] %s97
      %103 = dma.hbm_to_vmem [thread:$0]  %s7, 7296, %s98, [#allocation13], 192, 192, 12
    $region33: #{pre_predictions.1} parent=1 // pred_fallthru
      _
    // Predicated region
    $region34: #{pre_predictions.1} parent=1 // pred_check
      _
    $region35: #{pre_predictions.1} parent=1 // pred_check_branch
      %105 = sbr.rel (0) target = $region37
    $region36: #{pre_predictions.1} parent=1 // pred_region
      %s107 = ssub.s32 7296, 7296
      %108 = vsyncadd [#allocation13], %s107
      %s109 = sshll.u32 [#allocation14], 4
      %s110 = int_to_ptr.vmem [resolvable:$true] %s109
      %115 = dma.hbm_to_vmem [thread:$0]  %s8, 7296, %s110, [#allocation13], 192, 192, 12
    $region37: #{pre_predictions.1} parent=1 // pred_fallthru
      _
    // Predicated region
    $region38: #{pre_predictions.1} parent=1 // pred_check
      _
    $region39: #{pre_predictions.1} parent=1 // pred_check_branch
      %117 = sbr.rel (0) target = $region41
    $region40: #{pre_predictions.1} parent=1 // pred_region
      _
    $region41: #{pre_predictions.1} parent=1 // pred_fallthru
      _
    // Predicated region
    $region42: #{pre_predictions.1} parent=1 // pred_check
      _
    $region43: #{pre_predictions.1} parent=1 // pred_check_branch
      %119 = sbr.rel (0) target = $region45
    $region44: #{pre_predictions.1} parent=1 // pred_region
      _
    $region45: #{pre_predictions.1} parent=1 // pred_fallthru
      _
    // Predicated region
    $region46: #{pre_predictions.1} parent=1 // pred_check
      _
    $region47: #{pre_predictions.1} parent=1 // pred_check_branch
      %121 = sbr.rel (0) target = $region49
    $region48: #{pre_predictions.1} parent=1 // pred_region
      %s123 = ssub.s32 16, 16
      %124 = vsyncadd [#allocation5], %s123
      %s126 = sshll.u32 %s11, 4
      %s127 = int_to_ptr.vmem [resolvable:$true] %s126
      %129 = dma.vmem_to_smem %s127, 16, [#allocation15], [#allocation5]
    $region49: #{pre_predictions.1} parent=1 // pred_fallthru
      _
    // Predicated region
    $region50: #{pre_predictions.1} parent=1 // pred_check
      _
    $region51: #{pre_predictions.1} parent=1 // pred_check_branch
      %131 = sbr.rel (0) target = $region53
    $region52: #{pre_predictions.1} parent=1 // pred_region
      %132 = dma.done [#allocation3], 768
    $region53: #{pre_predictions.1} parent=1 // pred_fallthru
      _
    // Predicated region
    $region54: #{pre_predictions.1} parent=1 // pred_check
      _
    $region55: #{pre_predictions.1} parent=1 // pred_check_branch
      %134 = sbr.rel (0) target = $region57
    $region56: #{pre_predictions.1} parent=1 // pred_region
      %135 = dma.done [#allocation7], 768
    $region57: #{pre_predictions.1} parent=1 // pred_fallthru
      _
    // Predicated region
    $region58: #{pre_predictions.1} parent=1 // pred_check
      _
    $region59: #{pre_predictions.1} parent=1 // pred_check_branch
      %137 = sbr.rel (0) target = $region61
    $region60: #{pre_predictions.1} parent=1 // pred_region
      %138 = dma.done [#allocation7], 768
    $region61: #{pre_predictions.1} parent=1 // pred_fallthru
      _
    // Predicated region
    $region62: #{pre_predictions.1} parent=1 // pred_check
      _
    $region63: #{pre_predictions.1} parent=1 // pred_check_branch
      %140 = sbr.rel (0) target = $region65
    $region64: #{pre_predictions.1} parent=1 // pred_region
      %141 = dma.done [#allocation10], 7296
    $region65: #{pre_predictions.1} parent=1 // pred_fallthru
      _
    // Predicated region
    $region66: #{pre_predictions.1} parent=1 // pred_check
      _
    $region67: #{pre_predictions.1} parent=1 // pred_check_branch
      %143 = sbr.rel (0) target = $region69
    $region68: #{pre_predictions.1} parent=1 // pred_region
      %144 = dma.done [#allocation10], 7296
    $region69: #{pre_predictions.1} parent=1 // pred_fallthru
      _
    // Predicated region
    $region70: #{pre_predictions.1} parent=1 // pred_check
      _
    $region71: #{pre_predictions.1} parent=1 // pred_check_branch
      %146 = sbr.rel (0) target = $region73
    $region72: #{pre_predictions.1} parent=1 // pred_region
      %147 = dma.done [#allocation13], 7296
    $region73: #{pre_predictions.1} parent=1 // pred_fallthru
      _
    // Predicated region
    $region74: #{pre_predictions.1} parent=1 // pred_check
      _
    $region75: #{pre_predictions.1} parent=1 // pred_check_branch
      %149 = sbr.rel (0) target = $region77
    $region76: #{pre_predictions.1} parent=1 // pred_region
      %150 = dma.done [#allocation13], 7296
    $region77: #{pre_predictions.1} parent=1 // pred_fallthru
      _
    // Predicated region
    $region78: #{pre_predictions.1} parent=1 // pred_check
      _
    $region79: #{pre_predictions.1} parent=1 // pred_check_branch
      %152 = sbr.rel (0) target = $region81
    $region80: #{pre_predictions.1} parent=1 // pred_region
      %153 = dma.done [#allocation5], 16
    $region81: #{pre_predictions.1} parent=1 // pred_fallthru
      _
    %154 = sfence
    %v156 = vld [vmem:[#allocation2] sm:$0xff]
    %v157 = vld [vmem:[#allocation2 + $0x8] sm:$0xff]
    %v158 = vld [vmem:[#allocation2 + $0x10] sm:$0xff]
    %v159 = vld [vmem:[#allocation2 + $0x18] sm:$0xff]
    %v160 = vld [vmem:[#allocation2 + $0x20] sm:$0xff]
    %v161 = vld [vmem:[#allocation2 + $0x28] sm:$0xff]
    %v162 = vpack.c.bf16 %v159, %v156
    %v163 = vpack.c.bf16 %v160, %v157
    %v164 = vpack.c.bf16 %v161, %v158
    %v165 = vld [vmem:[#allocation6] sm:$0xff]
    %v166 = vld [vmem:[#allocation6 + $0x8] sm:$0xff]
    %v167 = vld [vmem:[#allocation6 + $0x10] sm:$0xff]
    %v168 = vld [vmem:[#allocation6 + $0x18] sm:$0xff]
    %v169 = vld [vmem:[#allocation6 + $0x20] sm:$0xff]
    %v170 = vld [vmem:[#allocation6 + $0x28] sm:$0xff]
    %v171 = vpack.c.bf16 %v168, %v165
    %v172 = vpack.c.bf16 %v169, %v166
    %v173 = vpack.c.bf16 %v170, %v167
    %v174 = vld [vmem:[#allocation8] sm:$0xff]
    %v175 = vld [vmem:[#allocation8 + $0x8] sm:$0xff]
    %v176 = vld [vmem:[#allocation8 + $0x10] sm:$0xff]
    %v177 = vld [vmem:[#allocation8 + $0x18] sm:$0xff]
    %v178 = vld [vmem:[#allocation8 + $0x20] sm:$0xff]
    %v179 = vld [vmem:[#allocation8 + $0x28] sm:$0xff]
    %v180 = vpack.c.bf16 %v177, %v174
    %v181 = vpack.c.bf16 %v178, %v175
    %v182 = vpack.c.bf16 %v179, %v176
    %v183 = vld [vmem:[#allocation9] sm:$0xff]
    %v184 = vld [vmem:[#allocation9 + $0x8] sm:$0xf]
    %v185 = vld [vmem:[#allocation9 + $0xc] sm:$0xff]
    %v186 = vld [vmem:[#allocation9 + $0x14] sm:$0xf]
    %v187 = vld [vmem:[#allocation9 + $0x18] sm:$0xff]
    %v188 = vld [vmem:[#allocation9 + $0x20] sm:$0xf]
    %v189 = vld [vmem:[#allocation9 + $0x24] sm:$0xff]
    %v190 = vld [vmem:[#allocation9 + $0x2c] sm:$0xf]
    %v191 = vld [vmem:[#allocation9 + $0x30] sm:$0xff]
    %v192 = vld [vmem:[#allocation9 + $0x38] sm:$0xf]
    %v193 = vld [vmem:[#allocation9 + $0x3c] sm:$0xff]
    %v194 = vld [vmem:[#allocation9 + $0x44] sm:$0xf]
    %v195 = vld [vmem:[#allocation9 + $0x48] sm:$0xff]
    %v196 = vld [vmem:[#allocation9 + $0x50] sm:$0xf]
    %v197 = vld [vmem:[#allocation9 + $0x54] sm:$0xff]
    %v198 = vld [vmem:[#allocation9 + $0x5c] sm:$0xf]
    %v199 = vld [vmem:[#allocation9 + $0x60] sm:$0xff]
    %v200 = vld [vmem:[#allocation9 + $0x68] sm:$0xf]
    %v201 = vld [vmem:[#allocation9 + $0x6c] sm:$0xff]
    %v202 = vld [vmem:[#allocation9 + $0x74] sm:$0xf]
    %v203 = vld [vmem:[#allocation9 + $0x78] sm:$0xff]
    %v204 = vld [vmem:[#allocation9 + $0x80] sm:$0xf]
    %v205 = vld [vmem:[#allocation9 + $0x84] sm:$0xff]
    %v206 = vld [vmem:[#allocation9 + $0x8c] sm:$0xf]
    %v207 = vld [vmem:[#allocation9 + $0x90] sm:$0xff]
    %v208 = vld [vmem:[#allocation9 + $0x98] sm:$0xf]
    %v209 = vld [vmem:[#allocation9 + $0x9c] sm:$0xff]
    %v210 = vld [vmem:[#allocation9 + $0xa4] sm:$0xf]
    %v211 = vld [vmem:[#allocation9 + $0xa8] sm:$0xff]
    %v212 = vld [vmem:[#allocation9 + $0xb0] sm:$0xf]
    %v213 = vld [vmem:[#allocation9 + $0xb4] sm:$0xff]
    %v214 = vld [vmem:[#allocation9 + $0xbc] sm:$0xf]
    %v215 = vld [vmem:[#allocation9 + $0xc0] sm:$0xff]
    %v216 = vld [vmem:[#allocation9 + $0xc8] sm:$0xf]
    %v217 = vld [vmem:[#allocation9 + $0xcc] sm:$0xff]
    %v218 = vld [vmem:[#allocation9 + $0xd4] sm:$0xf]
    %v219 = vld [vmem:[#allocation9 + $0xd8] sm:$0xff]
    %v220 = vld [vmem:[#allocation9 + $0xe0] sm:$0xf]
    %v221 = vld [vmem:[#allocation9 + $0xe4] sm:$0xff]
    %v222 = vld [vmem:[#allocation9 + $0xec] sm:$0xf]
    %v223 = vld [vmem:[#allocation9 + $0xf0] sm:$0xff]
    %v224 = vld [vmem:[#allocation9 + $0xf8] sm:$0xf]
    %v225 = vld [vmem:[#allocation9 + $0xfc] sm:$0xff]
    %v226 = vld [vmem:[#allocation9 + $0x104] sm:$0xf]
    %v227 = vld [vmem:[#allocation9 + $0x108] sm:$0xff]
    %v228 = vld [vmem:[#allocation9 + $0x110] sm:$0xf]
    %v229 = vld [vmem:[#allocation9 + $0x114] sm:$0xff]
    %v230 = vld [vmem:[#allocation9 + $0x11c] sm:$0xf]
    %v231 = vld [vmem:[#allocation9 + $0x120] sm:$0xff]
    %v232 = vld [vmem:[#allocation9 + $0x128] sm:$0xf]
    %v233 = vld [vmem:[#allocation9 + $0x12c] sm:$0xff]
    %v234 = vld [vmem:[#allocation9 + $0x134] sm:$0xf]
    %v235 = vld [vmem:[#allocation9 + $0x138] sm:$0xff]
    %v236 = vld [vmem:[#allocation9 + $0x140] sm:$0xf]
    %v237 = vld [vmem:[#allocation9 + $0x144] sm:$0xff]
    %v238 = vld [vmem:[#allocation9 + $0x14c] sm:$0xf]
    %v239 = vld [vmem:[#allocation9 + $0x150] sm:$0xff]
    %v240 = vld [vmem:[#allocation9 + $0x158] sm:$0xf]
    %v241 = vld [vmem:[#allocation9 + $0x15c] sm:$0xff]
    %v242 = vld [vmem:[#allocation9 + $0x164] sm:$0xf]
    %v243 = vld [vmem:[#allocation9 + $0x168] sm:$0xff]
    %v244 = vld [vmem:[#allocation9 + $0x170] sm:$0xf]
    %v245 = vld [vmem:[#allocation9 + $0x174] sm:$0xff]
    %v246 = vld [vmem:[#allocation9 + $0x17c] sm:$0xf]
    %v247 = vld [vmem:[#allocation9 + $0x180] sm:$0xff]
    %v248 = vld [vmem:[#allocation9 + $0x188] sm:$0xf]
    %v249 = vld [vmem:[#allocation9 + $0x18c] sm:$0xff]
    %v250 = vld [vmem:[#allocation9 + $0x194] sm:$0xf]
    %v251 = vld [vmem:[#allocation9 + $0x198] sm:$0xff]
    %v252 = vld [vmem:[#allocation9 + $0x1a0] sm:$0xf]
    %v253 = vld [vmem:[#allocation9 + $0x1a4] sm:$0xff]
    %v254 = vld [vmem:[#allocation9 + $0x1ac] sm:$0xf]
    %v255 = vld [vmem:[#allocation9 + $0x1b0] sm:$0xff]
    %v256 = vld [vmem:[#allocation9 + $0x1b8] sm:$0xf]
    %v257 = vld [vmem:[#allocation9 + $0x1bc] sm:$0x33]
    %v258 = vld [vmem:[#allocation9 + $0x1c4] sm:$0x3]
    %v259 = vld [vmem:[#allocation11] sm:$0xff]
    %v260 = vld [vmem:[#allocation11 + $0x8] sm:$0xf]
    %v261 = vld [vmem:[#allocation11 + $0xc] sm:$0xff]
    %v262 = vld [vmem:[#allocation11 + $0x14] sm:$0xf]
    %v263 = vld [vmem:[#allocation11 + $0x18] sm:$0xff]
    %v264 = vld [vmem:[#allocation11 + $0x20] sm:$0xf]
    %v265 = vld [vmem:[#allocation11 + $0x24] sm:$0xff]
    %v266 = vld [vmem:[#allocation11 + $0x2c] sm:$0xf]
    %v267 = vld [vmem:[#allocation11 + $0x30] sm:$0xff]
    %v268 = vld [vmem:[#allocation11 + $0x38] sm:$0xf]
    %v269 = vld [vmem:[#allocation11 + $0x3c] sm:$0xff]
    %v270 = vld [vmem:[#allocation11 + $0x44] sm:$0xf]
    %v271 = vld [vmem:[#allocation11 + $0x48] sm:$0xff]
    %v272 = vld [vmem:[#allocation11 + $0x50] sm:$0xf]
    %v273 = vld [vmem:[#allocation11 + $0x54] sm:$0xff]
    %v274 = vld [vmem:[#allocation11 + $0x5c] sm:$0xf]
    %v275 = vld [vmem:[#allocation11 + $0x60] sm:$0xff]
    %v276 = vld [vmem:[#allocation11 + $0x68] sm:$0xf]
    %v277 = vld [vmem:[#allocation11 + $0x6c] sm:$0xff]
    %v278 = vld [vmem:[#allocation11 + $0x74] sm:$0xf]
    %v279 = vld [vmem:[#allocation11 + $0x78] sm:$0xff]
    %v280 = vld [vmem:[#allocation11 + $0x80] sm:$0xf]
    %v281 = vld [vmem:[#allocation11 + $0x84] sm:$0xff]
    %v282 = vld [vmem:[#allocation11 + $0x8c] sm:$0xf]
    %v283 = vld [vmem:[#allocation11 + $0x90] sm:$0xff]
    %v284 = vld [vmem:[#allocation11 + $0x98] sm:$0xf]
    %v285 = vld [vmem:[#allocation11 + $0x9c] sm:$0xff]
    %v286 = vld [vmem:[#allocation11 + $0xa4] sm:$0xf]
    %v287 = vld [vmem:[#allocation11 + $0xa8] sm:$0xff]
    %v288 = vld [vmem:[#allocation11 + $0xb0] sm:$0xf]
    %v289 = vld [vmem:[#allocation11 + $0xb4] sm:$0xff]
    %v290 = vld [vmem:[#allocation11 + $0xbc] sm:$0xf]
    %v291 = vld [vmem:[#allocation11 + $0xc0] sm:$0xff]
    %v292 = vld [vmem:[#allocation11 + $0xc8] sm:$0xf]
    %v293 = vld [vmem:[#allocation11 + $0xcc] sm:$0xff]
    %v294 = vld [vmem:[#allocation11 + $0xd4] sm:$0xf]
    %v295 = vld [vmem:[#allocation11 + $0xd8] sm:$0xff]
    %v296 = vld [vmem:[#allocation11 + $0xe0] sm:$0xf]
    %v297 = vld [vmem:[#allocation11 + $0xe4] sm:$0xff]
    %v298 = vld [vmem:[#allocation11 + $0xec] sm:$0xf]
    %v299 = vld [vmem:[#allocation11 + $0xf0] sm:$0xff]
    %v300 = vld [vmem:[#allocation11 + $0xf8] sm:$0xf]
    %v301 = vld [vmem:[#allocation11 + $0xfc] sm:$0xff]
    %v302 = vld [vmem:[#allocation11 + $0x104] sm:$0xf]
    %v303 = vld [vmem:[#allocation11 + $0x108] sm:$0xff]
    %v304 = vld [vmem:[#allocation11 + $0x110] sm:$0xf]
    %v305 = vld [vmem:[#allocation11 + $0x114] sm:$0xff]
    %v306 = vld [vmem:[#allocation11 + $0x11c] sm:$0xf]
    %v307 = vld [vmem:[#allocation11 + $0x120] sm:$0xff]
    %v308 = vld [vmem:[#allocation11 + $0x128] sm:$0xf]
    %v309 = vld [vmem:[#allocation11 + $0x12c] sm:$0xff]
    %v310 = vld [vmem:[#allocation11 + $0x134] sm:$0xf]
    %v311 = vld [vmem:[#allocation11 + $0x138] sm:$0xff]
    %v312 = vld [vmem:[#allocation11 + $0x140] sm:$0xf]
    %v313 = vld [vmem:[#allocation11 + $0x144] sm:$0xff]
    %v314 = vld [vmem:[#allocation11 + $0x14c] sm:$0xf]
    %v315 = vld [vmem:[#allocation11 + $0x150] sm:$0xff]
    %v316 = vld [vmem:[#allocation11 + $0x158] sm:$0xf]
    %v317 = vld [vmem:[#allocation11 + $0x15c] sm:$0xff]
    %v318 = vld [vmem:[#allocation11 + $0x164] sm:$0xf]
    %v319 = vld [vmem:[#allocation11 + $0x168] sm:$0xff]
    %v320 = vld [vmem:[#allocation11 + $0x170] sm:$0xf]
    %v321 = vld [vmem:[#allocation11 + $0x174] sm:$0xff]
    %v322 = vld [vmem:[#allocation11 + $0x17c] sm:$0xf]
    %v323 = vld [vmem:[#allocation11 + $0x180] sm:$0xff]
    %v324 = vld [vmem:[#allocation11 + $0x188] sm:$0xf]
    %v325 = vld [vmem:[#allocation11 + $0x18c] sm:$0xff]
    %v326 = vld [vmem:[#allocation11 + $0x194] sm:$0xf]
    %v327 = vld [vmem:[#allocation11 + $0x198] sm:$0xff]
    %v328 = vld [vmem:[#allocation11 + $0x1a0] sm:$0xf]
    %v329 = vld [vmem:[#allocation11 + $0x1a4] sm:$0xff]
    %v330 = vld [vmem:[#allocation11 + $0x1ac] sm:$0xf]
    %v331 = vld [vmem:[#allocation11 + $0x1b0] sm:$0xff]
    %v332 = vld [vmem:[#allocation11 + $0x1b8] sm:$0xf]
    %v333 = vld [vmem:[#allocation11 + $0x1bc] sm:$0x33]
    %v334 = vld [vmem:[#allocation11 + $0x1c4] sm:$0x3]
    %v411 = vunpack.c.l.b16 %v259
    %v412 = vunpack.c.h.b16 %v259
    %v413 = vunpack.c.l.b16 %v260
    %v414 = vunpack.c.l.b16 %v261
    %v415 = vunpack.c.h.b16 %v261
    %v416 = vunpack.c.l.b16 %v262
    %v417 = vunpack.c.l.b16 %v263
    %v418 = vunpack.c.h.b16 %v263
    %v419 = vunpack.c.l.b16 %v264
    %v420 = vunpack.c.l.b16 %v265
    %v421 = vunpack.c.h.b16 %v265
    %v422 = vunpack.c.l.b16 %v266
    %v423 = vunpack.c.l.b16 %v267
    %v424 = vunpack.c.h.b16 %v267
    %v425 = vunpack.c.l.b16 %v268
    %v426 = vunpack.c.l.b16 %v269
    %v427 = vunpack.c.h.b16 %v269
    %v428 = vunpack.c.l.b16 %v270
    %v429 = vunpack.c.l.b16 %v271
    %v430 = vunpack.c.h.b16 %v271
    %v431 = vunpack.c.l.b16 %v272
    %v432 = vunpack.c.l.b16 %v273
    %v433 = vunpack.c.h.b16 %v273
    %v434 = vunpack.c.l.b16 %v274
    %v435 = vunpack.c.l.b16 %v275
    %v436 = vunpack.c.h.b16 %v275
    %v437 = vunpack.c.l.b16 %v276
    %v438 = vunpack.c.l.b16 %v277
    %v439 = vunpack.c.h.b16 %v277
    %v440 = vunpack.c.l.b16 %v278
    %v441 = vunpack.c.l.b16 %v279
    %v442 = vunpack.c.h.b16 %v279
    %v443 = vunpack.c.l.b16 %v280
    %v444 = vunpack.c.l.b16 %v281
    %v445 = vunpack.c.h.b16 %v281
    %v446 = vunpack.c.l.b16 %v282
    %v447 = vunpack.c.l.b16 %v283
    %v448 = vunpack.c.h.b16 %v283
    %v449 = vunpack.c.l.b16 %v284
    %v450 = vunpack.c.l.b16 %v285
    %v451 = vunpack.c.h.b16 %v285
    %v452 = vunpack.c.l.b16 %v286
    %v453 = vunpack.c.l.b16 %v287
    %v454 = vunpack.c.h.b16 %v287
    %v455 = vunpack.c.l.b16 %v288
    %v456 = vunpack.c.l.b16 %v289
    %v457 = vunpack.c.h.b16 %v289
    %v458 = vunpack.c.l.b16 %v290
    %v459 = vunpack.c.l.b16 %v291
    %v460 = vunpack.c.h.b16 %v291
    %v461 = vunpack.c.l.b16 %v292
    %v462 = vunpack.c.l.b16 %v293
    %v463 = vunpack.c.h.b16 %v293
    %v464 = vunpack.c.l.b16 %v294
    %v465 = vunpack.c.l.b16 %v295
    %v466 = vunpack.c.h.b16 %v295
    %v467 = vunpack.c.l.b16 %v296
    %v468 = vunpack.c.l.b16 %v297
    %v469 = vunpack.c.h.b16 %v297
    %v470 = vunpack.c.l.b16 %v298
    %v471 = vunpack.c.l.b16 %v299
    %v472 = vunpack.c.h.b16 %v299
    %v473 = vunpack.c.l.b16 %v300
    %v474 = vunpack.c.l.b16 %v301
    %v475 = vunpack.c.h.b16 %v301
    %v476 = vunpack.c.l.b16 %v302
    %v477 = vunpack.c.l.b16 %v303
    %v478 = vunpack.c.h.b16 %v303
    %v479 = vunpack.c.l.b16 %v304
    %v480 = vunpack.c.l.b16 %v305
    %v481 = vunpack.c.h.b16 %v305
    %v482 = vunpack.c.l.b16 %v306
    %v483 = vunpack.c.l.b16 %v307
    %v484 = vunpack.c.h.b16 %v307
    %v485 = vunpack.c.l.b16 %v308
    %v486 = vunpack.c.l.b16 %v309
    %v487 = vunpack.c.h.b16 %v309
    %v488 = vunpack.c.l.b16 %v310
    %v489 = vunpack.c.l.b16 %v311
    %v490 = vunpack.c.h.b16 %v311
    %v491 = vunpack.c.l.b16 %v312
    %v492 = vunpack.c.l.b16 %v313
    %v493 = vunpack.c.h.b16 %v313
    %v494 = vunpack.c.l.b16 %v314
    %v495 = vunpack.c.l.b16 %v315
    %v496 = vunpack.c.h.b16 %v315
    %v497 = vunpack.c.l.b16 %v316
    %v498 = vunpack.c.l.b16 %v317
    %v499 = vunpack.c.h.b16 %v317
    %v500 = vunpack.c.l.b16 %v318
    %v501 = vunpack.c.l.b16 %v319
    %v502 = vunpack.c.h.b16 %v319
    %v503 = vunpack.c.l.b16 %v320
    %v504 = vunpack.c.l.b16 %v321
    %v505 = vunpack.c.h.b16 %v321
    %v506 = vunpack.c.l.b16 %v322
    %v507 = vunpack.c.l.b16 %v323
    %v508 = vunpack.c.h.b16 %v323
    %v509 = vunpack.c.l.b16 %v324
    %v510 = vunpack.c.l.b16 %v325
    %v511 = vunpack.c.h.b16 %v325
    %v512 = vunpack.c.l.b16 %v326
    %v513 = vunpack.c.l.b16 %v327
    %v514 = vunpack.c.h.b16 %v327
    %v515 = vunpack.c.l.b16 %v328
    %v516 = vunpack.c.l.b16 %v329
    %v517 = vunpack.c.h.b16 %v329
    %v518 = vunpack.c.l.b16 %v330
    %v519 = vunpack.c.l.b16 %v331
    %v520 = vunpack.c.h.b16 %v331
    %v521 = vunpack.c.l.b16 %v332
    %v522 = vunpack.c.l.b16 %v333
    %v523 = vunpack.c.h.b16 %v333
    %v524 = vunpack.c.l.b16 %v334
    %v525 = vpack.c.b16 %v414, %v411
    %v526 = vpack.c.b16 %v415, %v412
    %v527 = vpack.c.b16 %v416, %v413
    %v528 = vpack.c.b16 %v420, %v417
    %v529 = vpack.c.b16 %v421, %v418
    %v530 = vpack.c.b16 %v422, %v419
    %v531 = vpack.c.b16 %v426, %v423
    %v532 = vpack.c.b16 %v427, %v424
    %v533 = vpack.c.b16 %v428, %v425
    %v534 = vpack.c.b16 %v432, %v429
    %v535 = vpack.c.b16 %v433, %v430
    %v536 = vpack.c.b16 %v434, %v431
    %v537 = vpack.c.b16 %v438, %v435
    %v538 = vpack.c.b16 %v439, %v436
    %v539 = vpack.c.b16 %v440, %v437
    %v540 = vpack.c.b16 %v444, %v441
    %v541 = vpack.c.b16 %v445, %v442
    %v542 = vpack.c.b16 %v446, %v443
    %v543 = vpack.c.b16 %v450, %v447
    %v544 = vpack.c.b16 %v451, %v448
    %v545 = vpack.c.b16 %v452, %v449
    %v546 = vpack.c.b16 %v456, %v453
    %v547 = vpack.c.b16 %v457, %v454
    %v548 = vpack.c.b16 %v458, %v455
    %v549 = vpack.c.b16 %v462, %v459
    %v550 = vpack.c.b16 %v463, %v460
    %v551 = vpack.c.b16 %v464, %v461
    %v552 = vpack.c.b16 %v468, %v465
    %v553 = vpack.c.b16 %v469, %v466
    %v554 = vpack.c.b16 %v470, %v467
    %v555 = vpack.c.b16 %v474, %v471
    %v556 = vpack.c.b16 %v475, %v472
    %v557 = vpack.c.b16 %v476, %v473
    %v558 = vpack.c.b16 %v480, %v477
    %v559 = vpack.c.b16 %v481, %v478
    %v560 = vpack.c.b16 %v482, %v479
    %v561 = vpack.c.b16 %v486, %v483
    %v562 = vpack.c.b16 %v487, %v484
    %v563 = vpack.c.b16 %v488, %v485
    %v564 = vpack.c.b16 %v492, %v489
    %v565 = vpack.c.b16 %v493, %v490
    %v566 = vpack.c.b16 %v494, %v491
    %v567 = vpack.c.b16 %v498, %v495
    %v568 = vpack.c.b16 %v499, %v496
    %v569 = vpack.c.b16 %v500, %v497
    %v570 = vpack.c.b16 %v504, %v501
    %v571 = vpack.c.b16 %v505, %v502
    %v572 = vpack.c.b16 %v506, %v503
    %v573 = vpack.c.b16 %v510, %v507
    %v574 = vpack.c.b16 %v511, %v508
    %v575 = vpack.c.b16 %v512, %v509
    %v576 = vpack.c.b16 %v516, %v513
    %v577 = vpack.c.b16 %v517, %v514
    %v578 = vpack.c.b16 %v518, %v515
    %v579 = vpack.c.b16 %v522, %v519
    %v580 = vpack.c.b16 %v523, %v520
    %v581 = vpack.c.b16 %v524, %v521
    %vm636 = vcmask 359424
    %v638 = vsel %vm636, %v182, 0
    %vm640 = vcmask 1045504
    %v642 = vsel %vm640, %v579, 0
    %v645 = vsel %vm640, %v580, 0
    %v648 = vsel %vm640, %v581, 0
    %650 = vmatprep.subr.bf16.mxu0 %v547
    %651 = vmatpush1.bf16.msra.mxu0 %v546
    %652 = vmatprep.subr.bf16.mxu0 %v544
    %653 = vmatpush1.bf16.msra.mxu0 %v543
    %654 = vmatprep.subr.bf16.mxu0 %v541
    %655 = vmatpush1.bf16.msra.mxu0 %v540
    %656 = vmatprep.subr.bf16.mxu0 %v538
    %657 = vmatpush1.bf16.msra.mxu0 %v537
    %658 = vmatprep.subr.bf16.mxu0 %v535
    %659 = vmatpush1.bf16.msra.mxu0 %v534
    %660 = vmatprep.subr.bf16.mxu0 %v532
    %661 = vmatpush1.bf16.msra.mxu0 %v531
    %662 = vmatprep.subr.bf16.mxu0 %v529
    %663 = vmatpush1.bf16.msra.mxu0 %v528
    %664 = vmatprep.subr.bf16.mxu0 %v526
    %665 = vmatpush1.bf16.msra.mxu0 %v525
    %666 = vmatprep.subr.bf16.mxu0 %v571
    %667 = vmatpush2.bf16.msra.mxu0 %v570
    %668 = vmatprep.subr.bf16.mxu0 %v568
    %669 = vmatpush2.bf16.msra.mxu0 %v567
    %670 = vmatprep.subr.bf16.mxu0 %v565
    %671 = vmatpush2.bf16.msra.mxu0 %v564
    %672 = vmatprep.subr.bf16.mxu0 %v562
    %673 = vmatpush2.bf16.msra.mxu0 %v561
    %674 = vmatprep.subr.bf16.mxu0 %v559
    %675 = vmatpush2.bf16.msra.mxu0 %v558
    %676 = vmatprep.subr.bf16.mxu0 %v556
    %677 = vmatpush2.bf16.msra.mxu0 %v555
    %678 = vmatprep.subr.bf16.mxu0 %v553
    %679 = vmatpush2.bf16.msra.mxu0 %v552
    %680 = vmatprep.subr.bf16.mxu0 %v550
    %681 = vmatpush2.bf16.msra.mxu0 %v549
    %682 = vmatprep.mubr.bf16.mxu0 %v181
    %683 = vmatmul.mubr.bf16.gmra.mxu0 %v180
    %v684 = vpop.f32.mrf.mxu0
    %v685 = vadd.f32 0.0, %v684
    %v686 = vpop.f32.mrf.mxu0
    %v687 = vadd.f32 0.0, %v686
    %v688 = vpop.f32.mrf.mxu0
    %v689 = vadd.f32 0.0, %v688
    %v690 = vpop.f32.mrf.mxu0
    %v691 = vadd.f32 0.0, %v690
    %692 = vdwg.mxu0
    %693 = vmatprep.subr.bf16.mxu0 0
    %694 = vmatpush1.bf16.msra.mxu0 0
    %695 = vmatprep.subr.bf16.mxu0 0
    %696 = vmatpush1.bf16.msra.mxu0 0
    %697 = vmatprep.subr.bf16.mxu0 0
    %698 = vmatpush1.bf16.msra.mxu0 0
    %699 = vmatprep.subr.bf16.mxu0 0
    %700 = vmatpush1.bf16.msra.mxu0 0
    %701 = vmatprep.subr.bf16.mxu0 0
    %702 = vmatpush1.bf16.msra.mxu0 0
    %703 = vmatprep.subr.bf16.mxu0 %v645
    %704 = vmatpush1.bf16.msra.mxu0 %v642
    %705 = vmatprep.subr.bf16.mxu0 %v577
    %706 = vmatpush1.bf16.msra.mxu0 %v576
    %707 = vmatprep.subr.bf16.mxu0 %v574
    %708 = vmatpush1.bf16.msra.mxu0 %v573
    %709 = vmatprep.subr.bf16.mxu0 0
    %710 = vmatpush2.bf16.msra.mxu0 0
    %711 = vmatprep.subr.bf16.mxu0 0
    %712 = vmatpush2.bf16.msra.mxu0 0
    %713 = vmatprep.subr.bf16.mxu0 0
    %714 = vmatpush2.bf16.msra.mxu0 0
    %715 = vmatprep.subr.bf16.mxu0 0
    %716 = vmatpush2.bf16.msra.mxu0 0
    %717 = vmatprep.subr.bf16.mxu0 0
    %718 = vmatpush2.bf16.msra.mxu0 0
    %719 = vmatprep.subr.bf16.mxu0 0
    %720 = vmatpush2.bf16.msra.mxu0 0
    %721 = vmatprep.subr.bf16.mxu0 0
    %722 = vmatpush2.bf16.msra.mxu0 0
    %723 = vmatprep.subr.bf16.mxu0 0
    %724 = vmatpush2.bf16.msra.mxu0 0
    %725 = vmatprep.mubr.bf16.mxu0 0
    %726 = vmatmul.mubr.bf16.gmra.mxu0 %v638
    %v727 = vpop.f32.mrf.mxu0
    %v728 = vadd.f32 %v685, %v727
    %v729 = vpop.f32.mrf.mxu0
    %v730 = vadd.f32 %v687, %v729
    %v731 = vpop.f32.mrf.mxu0
    %v732 = vadd.f32 %v689, %v731
    %v733 = vpop.f32.mrf.mxu0
    %v734 = vadd.f32 %v691, %v733
    %735 = vdwg.mxu0
    %736 = vmatprep.subr.bf16.mxu0 0
    %737 = vmatpush1.bf16.msra.mxu0 %v548
    %738 = vmatprep.subr.bf16.mxu0 0
    %739 = vmatpush1.bf16.msra.mxu0 %v545
    %740 = vmatprep.subr.bf16.mxu0 0
    %741 = vmatpush1.bf16.msra.mxu0 %v542
    %742 = vmatprep.subr.bf16.mxu0 0
    %743 = vmatpush1.bf16.msra.mxu0 %v539
    %744 = vmatprep.subr.bf16.mxu0 0
    %745 = vmatpush1.bf16.msra.mxu0 %v536
    %746 = vmatprep.subr.bf16.mxu0 0
    %747 = vmatpush1.bf16.msra.mxu0 %v533
    %748 = vmatprep.subr.bf16.mxu0 0
    %749 = vmatpush1.bf16.msra.mxu0 %v530
    %750 = vmatprep.subr.bf16.mxu0 0
    %751 = vmatpush1.bf16.msra.mxu0 %v527
    %752 = vmatprep.subr.bf16.mxu0 0
    %753 = vmatpush2.bf16.msra.mxu0 %v572
    %754 = vmatprep.subr.bf16.mxu0 0
    %755 = vmatpush2.bf16.msra.mxu0 %v569
    %756 = vmatprep.subr.bf16.mxu0 0
    %757 = vmatpush2.bf16.msra.mxu0 %v566
    %758 = vmatprep.subr.bf16.mxu0 0
    %759 = vmatpush2.bf16.msra.mxu0 %v563
    %760 = vmatprep.subr.bf16.mxu0 0
    %761 = vmatpush2.bf16.msra.mxu0 %v560
    %762 = vmatprep.subr.bf16.mxu0 0
    %763 = vmatpush2.bf16.msra.mxu0 %v557
    %764 = vmatprep.subr.bf16.mxu0 0
    %765 = vmatpush2.bf16.msra.mxu0 %v554
    %766 = vmatprep.subr.bf16.mxu0 0
    %767 = vmatpush2.bf16.msra.mxu0 %v551
    %768 = vmatprep.mubr.bf16.mxu0 %v181
    %769 = vmatmul.mubr.bf16.gmra.mxu0 %v180
    %v770 = vpop.f32.mrf.mxu0
    %v771 = vadd.f32 0.0, %v770
    %v772 = vpop.f32.mrf.mxu0
    %v773 = vpop.f32.mrf.mxu0
    %v774 = vadd.f32 0.0, %v773
    %v775 = vpop.f32.mrf.mxu0
    %776 = vdwg.mxu0
    %777 = vmatprep.subr.bf16.mxu0 0
    %778 = vmatpush1.bf16.msra.mxu0 0
    %779 = vmatprep.subr.bf16.mxu0 0
    %780 = vmatpush1.bf16.msra.mxu0 0
    %781 = vmatprep.subr.bf16.mxu0 0
    %782 = vmatpush1.bf16.msra.mxu0 0
    %783 = vmatprep.subr.bf16.mxu0 0
    %784 = vmatpush1.bf16.msra.mxu0 0
    %785 = vmatprep.subr.bf16.mxu0 0
    %786 = vmatpush1.bf16.msra.mxu0 0
    %787 = vmatprep.subr.bf16.mxu0 0
    %788 = vmatpush1.bf16.msra.mxu0 %v648
    %789 = vmatprep.subr.bf16.mxu0 0
    %790 = vmatpush1.bf16.msra.mxu0 %v578
    %791 = vmatprep.subr.bf16.mxu0 0
    %792 = vmatpush1.bf16.msra.mxu0 %v575
    %793 = vmatprep.subr.bf16.mxu0 0
    %794 = vmatpush2.bf16.msra.mxu0 0
    %795 = vmatprep.subr.bf16.mxu0 0
    %796 = vmatpush2.bf16.msra.mxu0 0
    %797 = vmatprep.subr.bf16.mxu0 0
    %798 = vmatpush2.bf16.msra.mxu0 0
    %799 = vmatprep.subr.bf16.mxu0 0
    %800 = vmatpush2.bf16.msra.mxu0 0
    %801 = vmatprep.subr.bf16.mxu0 0
    %802 = vmatpush2.bf16.msra.mxu0 0
    %803 = vmatprep.subr.bf16.mxu0 0
    %804 = vmatpush2.bf16.msra.mxu0 0
    %805 = vmatprep.subr.bf16.mxu0 0
    %806 = vmatpush2.bf16.msra.mxu0 0
    %807 = vmatprep.subr.bf16.mxu0 0
    %808 = vmatpush2.bf16.msra.mxu0 0
    %809 = vmatprep.mubr.bf16.mxu0 0
    %810 = vmatmul.mubr.bf16.gmra.mxu0 %v638
    %v811 = vpop.f32.mrf.mxu0
    %v812 = vadd.f32 %v771, %v811
    %v813 = vpop.f32.mrf.mxu0
    %v814 = vpop.f32.mrf.mxu0
    %v815 = vadd.f32 %v774, %v814
    %v816 = vpop.f32.mrf.mxu0
    %817 = vdwg.mxu0
    %v894 = vunpack.c.l.b16 %v183
    %v895 = vunpack.c.h.b16 %v183
    %v896 = vunpack.c.l.b16 %v184
    %v897 = vunpack.c.l.b16 %v185
    %v898 = vunpack.c.h.b16 %v185
    %v899 = vunpack.c.l.b16 %v186
    %v900 = vunpack.c.l.b16 %v187
    %v901 = vunpack.c.h.b16 %v187
    %v902 = vunpack.c.l.b16 %v188
    %v903 = vunpack.c.l.b16 %v189
    %v904 = vunpack.c.h.b16 %v189
    %v905 = vunpack.c.l.b16 %v190
    %v906 = vunpack.c.l.b16 %v191
    %v907 = vunpack.c.h.b16 %v191
    %v908 = vunpack.c.l.b16 %v192
    %v909 = vunpack.c.l.b16 %v193
    %v910 = vunpack.c.h.b16 %v193
    %v911 = vunpack.c.l.b16 %v194
    %v912 = vunpack.c.l.b16 %v195
    %v913 = vunpack.c.h.b16 %v195
    %v914 = vunpack.c.l.b16 %v196
    %v915 = vunpack.c.l.b16 %v197
    %v916 = vunpack.c.h.b16 %v197
    %v917 = vunpack.c.l.b16 %v198
    %v918 = vunpack.c.l.b16 %v199
    %v919 = vunpack.c.h.b16 %v199
    %v920 = vunpack.c.l.b16 %v200
    %v921 = vunpack.c.l.b16 %v201
    %v922 = vunpack.c.h.b16 %v201
    %v923 = vunpack.c.l.b16 %v202
    %v924 = vunpack.c.l.b16 %v203
    %v925 = vunpack.c.h.b16 %v203
    %v926 = vunpack.c.l.b16 %v204
    %v927 = vunpack.c.l.b16 %v205
    %v928 = vunpack.c.h.b16 %v205
    %v929 = vunpack.c.l.b16 %v206
    %v930 = vunpack.c.l.b16 %v207
    %v931 = vunpack.c.h.b16 %v207
    %v932 = vunpack.c.l.b16 %v208
    %v933 = vunpack.c.l.b16 %v209
    %v934 = vunpack.c.h.b16 %v209
    %v935 = vunpack.c.l.b16 %v210
    %v936 = vunpack.c.l.b16 %v211
    %v937 = vunpack.c.h.b16 %v211
    %v938 = vunpack.c.l.b16 %v212
    %v939 = vunpack.c.l.b16 %v213
    %v940 = vunpack.c.h.b16 %v213
    %v941 = vunpack.c.l.b16 %v214
    %v942 = vunpack.c.l.b16 %v215
    %v943 = vunpack.c.h.b16 %v215
    %v944 = vunpack.c.l.b16 %v216
    %v945 = vunpack.c.l.b16 %v217
    %v946 = vunpack.c.h.b16 %v217
    %v947 = vunpack.c.l.b16 %v218
    %v948 = vunpack.c.l.b16 %v219
    %v949 = vunpack.c.h.b16 %v219
    %v950 = vunpack.c.l.b16 %v220
    %v951 = vunpack.c.l.b16 %v221
    %v952 = vunpack.c.h.b16 %v221
    %v953 = vunpack.c.l.b16 %v222
    %v954 = vunpack.c.l.b16 %v223
    %v955 = vunpack.c.h.b16 %v223
    %v956 = vunpack.c.l.b16 %v224
    %v957 = vunpack.c.l.b16 %v225
    %v958 = vunpack.c.h.b16 %v225
    %v959 = vunpack.c.l.b16 %v226
    %v960 = vunpack.c.l.b16 %v227
    %v961 = vunpack.c.h.b16 %v227
    %v962 = vunpack.c.l.b16 %v228
    %v963 = vunpack.c.l.b16 %v229
    %v964 = vunpack.c.h.b16 %v229
    %v965 = vunpack.c.l.b16 %v230
    %v966 = vunpack.c.l.b16 %v231
    %v967 = vunpack.c.h.b16 %v231
    %v968 = vunpack.c.l.b16 %v232
    %v969 = vunpack.c.l.b16 %v233
    %v970 = vunpack.c.h.b16 %v233
    %v971 = vunpack.c.l.b16 %v234
    %v972 = vunpack.c.l.b16 %v235
    %v973 = vunpack.c.h.b16 %v235
    %v974 = vunpack.c.l.b16 %v236
    %v975 = vunpack.c.l.b16 %v237
    %v976 = vunpack.c.h.b16 %v237
    %v977 = vunpack.c.l.b16 %v238
    %v978 = vunpack.c.l.b16 %v239
    %v979 = vunpack.c.h.b16 %v239
    %v980 = vunpack.c.l.b16 %v240
    %v981 = vunpack.c.l.b16 %v241
    %v982 = vunpack.c.h.b16 %v241
    %v983 = vunpack.c.l.b16 %v242
    %v984 = vunpack.c.l.b16 %v243
    %v985 = vunpack.c.h.b16 %v243
    %v986 = vunpack.c.l.b16 %v244
    %v987 = vunpack.c.l.b16 %v245
    %v988 = vunpack.c.h.b16 %v245
    %v989 = vunpack.c.l.b16 %v246
    %v990 = vunpack.c.l.b16 %v247
    %v991 = vunpack.c.h.b16 %v247
    %v992 = vunpack.c.l.b16 %v248
    %v993 = vunpack.c.l.b16 %v249
    %v994 = vunpack.c.h.b16 %v249
    %v995 = vunpack.c.l.b16 %v250
    %v996 = vunpack.c.l.b16 %v251
    %v997 = vunpack.c.h.b16 %v251
    %v998 = vunpack.c.l.b16 %v252
    %v999 = vunpack.c.l.b16 %v253
    %v1000 = vunpack.c.h.b16 %v253
    %v1001 = vunpack.c.l.b16 %v254
    %v1002 = vunpack.c.l.b16 %v255
    %v1003 = vunpack.c.h.b16 %v255
    %v1004 = vunpack.c.l.b16 %v256
    %v1005 = vunpack.c.l.b16 %v257
    %v1006 = vunpack.c.h.b16 %v257
    %v1007 = vunpack.c.l.b16 %v258
    %v1008 = vpack.c.b16 %v897, %v894
    %v1009 = vpack.c.b16 %v898, %v895
    %v1010 = vpack.c.b16 %v899, %v896
    %v1011 = vpack.c.b16 %v903, %v900
    %v1012 = vpack.c.b16 %v904, %v901
    %v1013 = vpack.c.b16 %v905, %v902
    %v1014 = vpack.c.b16 %v909, %v906
    %v1015 = vpack.c.b16 %v910, %v907
    %v1016 = vpack.c.b16 %v911, %v908
    %v1017 = vpack.c.b16 %v915, %v912
    %v1018 = vpack.c.b16 %v916, %v913
    %v1019 = vpack.c.b16 %v917, %v914
    %v1020 = vpack.c.b16 %v921, %v918
    %v1021 = vpack.c.b16 %v922, %v919
    %v1022 = vpack.c.b16 %v923, %v920
    %v1023 = vpack.c.b16 %v927, %v924
    %v1024 = vpack.c.b16 %v928, %v925
    %v1025 = vpack.c.b16 %v929, %v926
    %v1026 = vpack.c.b16 %v933, %v930
    %v1027 = vpack.c.b16 %v934, %v931
    %v1028 = vpack.c.b16 %v935, %v932
    %v1029 = vpack.c.b16 %v939, %v936
    %v1030 = vpack.c.b16 %v940, %v937
    %v1031 = vpack.c.b16 %v941, %v938
    %v1032 = vpack.c.b16 %v945, %v942
    %v1033 = vpack.c.b16 %v946, %v943
    %v1034 = vpack.c.b16 %v947, %v944
    %v1035 = vpack.c.b16 %v951, %v948
    %v1036 = vpack.c.b16 %v952, %v949
    %v1037 = vpack.c.b16 %v953, %v950
    %v1038 = vpack.c.b16 %v957, %v954
    %v1039 = vpack.c.b16 %v958, %v955
    %v1040 = vpack.c.b16 %v959, %v956
    %v1041 = vpack.c.b16 %v963, %v960
    %v1042 = vpack.c.b16 %v964, %v961
    %v1043 = vpack.c.b16 %v965, %v962
    %v1044 = vpack.c.b16 %v969, %v966
    %v1045 = vpack.c.b16 %v970, %v967
    %v1046 = vpack.c.b16 %v971, %v968
    %v1047 = vpack.c.b16 %v975, %v972
    %v1048 = vpack.c.b16 %v976, %v973
    %v1049 = vpack.c.b16 %v977, %v974
    %v1050 = vpack.c.b16 %v981, %v978
    %v1051 = vpack.c.b16 %v982, %v979
    %v1052 = vpack.c.b16 %v983, %v980
    %v1053 = vpack.c.b16 %v987, %v984
    %v1054 = vpack.c.b16 %v988, %v985
    %v1055 = vpack.c.b16 %v989, %v986
    %v1056 = vpack.c.b16 %v993, %v990
    %v1057 = vpack.c.b16 %v994, %v991
    %v1058 = vpack.c.b16 %v995, %v992
    %v1059 = vpack.c.b16 %v999, %v996
    %v1060 = vpack.c.b16 %v1000, %v997
    %v1061 = vpack.c.b16 %v1001, %v998
    %v1062 = vpack.c.b16 %v1005, %v1002
    %v1063 = vpack.c.b16 %v1006, %v1003
    %v1064 = vpack.c.b16 %v1007, %v1004
    %v1120 = vsel %vm636, %v164, 0
    %v1123 = vsel %vm640, %v1062, 0
    %v1126 = vsel %vm640, %v1063, 0
    %v1129 = vsel %vm640, %v1064, 0
    %1131 = vmatprep.subr.bf16.mxu0 %v1030
    %1132 = vmatpush1.bf16.msra.mxu0 %v1029
    %1133 = vmatprep.subr.bf16.mxu0 %v1027
    %1134 = vmatpush1.bf16.msra.mxu0 %v1026
    %1135 = vmatprep.subr.bf16.mxu0 %v1024
    %1136 = vmatpush1.bf16.msra.mxu0 %v1023
    %1137 = vmatprep.subr.bf16.mxu0 %v1021
    %1138 = vmatpush1.bf16.msra.mxu0 %v1020
    %1139 = vmatprep.subr.bf16.mxu0 %v1018
    %1140 = vmatpush1.bf16.msra.mxu0 %v1017
    %1141 = vmatprep.subr.bf16.mxu0 %v1015
    %1142 = vmatpush1.bf16.msra.mxu0 %v1014
    %1143 = vmatprep.subr.bf16.mxu0 %v1012
    %1144 = vmatpush1.bf16.msra.mxu0 %v1011
    %1145 = vmatprep.subr.bf16.mxu0 %v1009
    %1146 = vmatpush1.bf16.msra.mxu0 %v1008
    %1147 = vmatprep.subr.bf16.mxu0 %v1054
    %1148 = vmatpush2.bf16.msra.mxu0 %v1053
    %1149 = vmatprep.subr.bf16.mxu0 %v1051
    %1150 = vmatpush2.bf16.msra.mxu0 %v1050
    %1151 = vmatprep.subr.bf16.mxu0 %v1048
    %1152 = vmatpush2.bf16.msra.mxu0 %v1047
    %1153 = vmatprep.subr.bf16.mxu0 %v1045
    %1154 = vmatpush2.bf16.msra.mxu0 %v1044
    %1155 = vmatprep.subr.bf16.mxu0 %v1042
    %1156 = vmatpush2.bf16.msra.mxu0 %v1041
    %1157 = vmatprep.subr.bf16.mxu0 %v1039
    %1158 = vmatpush2.bf16.msra.mxu0 %v1038
    %1159 = vmatprep.subr.bf16.mxu0 %v1036
    %1160 = vmatpush2.bf16.msra.mxu0 %v1035
    %1161 = vmatprep.subr.bf16.mxu0 %v1033
    %1162 = vmatpush2.bf16.msra.mxu0 %v1032
    %1163 = vmatprep.mubr.bf16.mxu0 %v163
    %1164 = vmatmul.mubr.bf16.gmra.mxu0 %v162
    %v1165 = vpop.f32.mrf.mxu0
    %v1166 = vadd.f32 %v728, %v1165
    %v1167 = vpop.f32.mrf.mxu0
    %v1168 = vadd.f32 %v730, %v1167
    %v1169 = vpop.f32.mrf.mxu0
    %v1170 = vadd.f32 %v732, %v1169
    %v1171 = vpop.f32.mrf.mxu0
    %v1172 = vadd.f32 %v734, %v1171
    %1173 = vdwg.mxu0
    %1174 = vmatprep.subr.bf16.mxu0 0
    %1175 = vmatpush1.bf16.msra.mxu0 0
    %1176 = vmatprep.subr.bf16.mxu0 0
    %1177 = vmatpush1.bf16.msra.mxu0 0
    %1178 = vmatprep.subr.bf16.mxu0 0
    %1179 = vmatpush1.bf16.msra.mxu0 0
    %1180 = vmatprep.subr.bf16.mxu0 0
    %1181 = vmatpush1.bf16.msra.mxu0 0
    %1182 = vmatprep.subr.bf16.mxu0 0
    %1183 = vmatpush1.bf16.msra.mxu0 0
    %1184 = vmatprep.subr.bf16.mxu0 %v1126
    %1185 = vmatpush1.bf16.msra.mxu0 %v1123
    %1186 = vmatprep.subr.bf16.mxu0 %v1060
    %1187 = vmatpush1.bf16.msra.mxu0 %v1059
    %1188 = vmatprep.subr.bf16.mxu0 %v1057
    %1189 = vmatpush1.bf16.msra.mxu0 %v1056
    %1190 = vmatprep.subr.bf16.mxu0 0
    %1191 = vmatpush2.bf16.msra.mxu0 0
    %1192 = vmatprep.subr.bf16.mxu0 0
    %1193 = vmatpush2.bf16.msra.mxu0 0
    %1194 = vmatprep.subr.bf16.mxu0 0
    %1195 = vmatpush2.bf16.msra.mxu0 0
    %1196 = vmatprep.subr.bf16.mxu0 0
    %1197 = vmatpush2.bf16.msra.mxu0 0
    %1198 = vmatprep.subr.bf16.mxu0 0
    %1199 = vmatpush2.bf16.msra.mxu0 0
    %1200 = vmatprep.subr.bf16.mxu0 0
    %1201 = vmatpush2.bf16.msra.mxu0 0
    %1202 = vmatprep.subr.bf16.mxu0 0
    %1203 = vmatpush2.bf16.msra.mxu0 0
    %1204 = vmatprep.subr.bf16.mxu0 0
    %1205 = vmatpush2.bf16.msra.mxu0 0
    %1206 = vmatprep.mubr.bf16.mxu0 0
    %1207 = vmatmul.mubr.bf16.gmra.mxu0 %v1120
    %v1208 = vpop.f32.mrf.mxu0
    %v1209 = vadd.f32 %v1166, %v1208
    %v1210 = vpop.f32.mrf.mxu0
    %v1211 = vadd.f32 %v1168, %v1210
    %v1212 = vpop.f32.mrf.mxu0
    %v1213 = vadd.f32 %v1170, %v1212
    %v1214 = vpop.f32.mrf.mxu0
    %v1215 = vadd.f32 %v1172, %v1214
    %1216 = vdwg.mxu0
    %1217 = vmatprep.subr.bf16.mxu0 0
    %1218 = vmatpush1.bf16.msra.mxu0 %v1031
    %1219 = vmatprep.subr.bf16.mxu0 0
    %1220 = vmatpush1.bf16.msra.mxu0 %v1028
    %1221 = vmatprep.subr.bf16.mxu0 0
    %1222 = vmatpush1.bf16.msra.mxu0 %v1025
    %1223 = vmatprep.subr.bf16.mxu0 0
    %1224 = vmatpush1.bf16.msra.mxu0 %v1022
    %1225 = vmatprep.subr.bf16.mxu0 0
    %1226 = vmatpush1.bf16.msra.mxu0 %v1019
    %1227 = vmatprep.subr.bf16.mxu0 0
    %1228 = vmatpush1.bf16.msra.mxu0 %v1016
    %1229 = vmatprep.subr.bf16.mxu0 0
    %1230 = vmatpush1.bf16.msra.mxu0 %v1013
    %1231 = vmatprep.subr.bf16.mxu0 0
    %1232 = vmatpush1.bf16.msra.mxu0 %v1010
    %1233 = vmatprep.subr.bf16.mxu0 0
    %1234 = vmatpush2.bf16.msra.mxu0 %v1055
    %1235 = vmatprep.subr.bf16.mxu0 0
    %1236 = vmatpush2.bf16.msra.mxu0 %v1052
    %1237 = vmatprep.subr.bf16.mxu0 0
    %1238 = vmatpush2.bf16.msra.mxu0 %v1049
    %1239 = vmatprep.subr.bf16.mxu0 0
    %1240 = vmatpush2.bf16.msra.mxu0 %v1046
    %1241 = vmatprep.subr.bf16.mxu0 0
    %1242 = vmatpush2.bf16.msra.mxu0 %v1043
    %1243 = vmatprep.subr.bf16.mxu0 0
    %1244 = vmatpush2.bf16.msra.mxu0 %v1040
    %1245 = vmatprep.subr.bf16.mxu0 0
    %1246 = vmatpush2.bf16.msra.mxu0 %v1037
    %1247 = vmatprep.subr.bf16.mxu0 0
    %1248 = vmatpush2.bf16.msra.mxu0 %v1034
    %1249 = vmatprep.mubr.bf16.mxu0 %v163
    %1250 = vmatmul.mubr.bf16.gmra.mxu0 %v162
    %v1251 = vpop.f32.mrf.mxu0
    %v1252 = vadd.f32 %v812, %v1251
    %v1253 = vpop.f32.mrf.mxu0
    %v1254 = vpop.f32.mrf.mxu0
    %v1255 = vadd.f32 %v815, %v1254
    %v1256 = vpop.f32.mrf.mxu0
    %1257 = vdwg.mxu0
    %1258 = vmatprep.subr.bf16.mxu0 0
    %1259 = vmatpush1.bf16.msra.mxu0 0
    %1260 = vmatprep.subr.bf16.mxu0 0
    %1261 = vmatpush1.bf16.msra.mxu0 0
    %1262 = vmatprep.subr.bf16.mxu0 0
    %1263 = vmatpush1.bf16.msra.mxu0 0
    %1264 = vmatprep.subr.bf16.mxu0 0
    %1265 = vmatpush1.bf16.msra.mxu0 0
    %1266 = vmatprep.subr.bf16.mxu0 0
    %1267 = vmatpush1.bf16.msra.mxu0 0
    %1268 = vmatprep.subr.bf16.mxu0 0
    %1269 = vmatpush1.bf16.msra.mxu0 %v1129
    %1270 = vmatprep.subr.bf16.mxu0 0
    %1271 = vmatpush1.bf16.msra.mxu0 %v1061
    %1272 = vmatprep.subr.bf16.mxu0 0
    %1273 = vmatpush1.bf16.msra.mxu0 %v1058
    %1274 = vmatprep.subr.bf16.mxu0 0
    %1275 = vmatpush2.bf16.msra.mxu0 0
    %1276 = vmatprep.subr.bf16.mxu0 0
    %1277 = vmatpush2.bf16.msra.mxu0 0
    %1278 = vmatprep.subr.bf16.mxu0 0
    %1279 = vmatpush2.bf16.msra.mxu0 0
    %1280 = vmatprep.subr.bf16.mxu0 0
    %1281 = vmatpush2.bf16.msra.mxu0 0
    %1282 = vmatprep.subr.bf16.mxu0 0
    %1283 = vmatpush2.bf16.msra.mxu0 0
    %1284 = vmatprep.subr.bf16.mxu0 0
    %1285 = vmatpush2.bf16.msra.mxu0 0
    %1286 = vmatprep.subr.bf16.mxu0 0
    %1287 = vmatpush2.bf16.msra.mxu0 0
    %1288 = vmatprep.subr.bf16.mxu0 0
    %1289 = vmatpush2.bf16.msra.mxu0 0
    %1290 = vmatprep.mubr.bf16.mxu0 0
    %1291 = vmatmul.mubr.bf16.gmra.mxu0 %v1120
    %v1292 = vpop.f32.mrf.mxu0
    %v1293 = vadd.f32 %v1252, %v1292
    %v1294 = vpop.f32.mrf.mxu0
    %v1295 = vpop.f32.mrf.mxu0
    %v1296 = vadd.f32 %v1255, %v1295
    %v1297 = vpop.f32.mrf.mxu0
    %1298 = vdwg.mxu0
    %v1299 = vld [vmem:[%s5] sm:$0x7]
    %v1301 = vlaneseq
    %v1302 = vshrl.u32 %v1301, 7
    %v1303 = vsub.s32 0, %v1302
    %v1304 = vrot.slane %v1299, %v1303
    %v1305 = vlaneseq
    %v1306 = vshrl.u32 %v1305, 7
    %v1307 = vsub.s32 1, %v1306
    %v1308 = vrot.slane %v1299, %v1307
    %v1309 = vlaneseq
    %v1310 = vshrl.u32 %v1309, 7
    %v1311 = vsub.s32 2, %v1310
    %v1312 = vrot.slane %v1299, %v1311
    %v1316 = vadd.f32 %v1209, %v1304
    %v1317 = vadd.f32 %v1211, %v1308
    %v1318 = vadd.f32 %v1293, %v1312
    %v1319 = vadd.f32 %v1213, %v1304
    %v1320 = vadd.f32 %v1215, %v1308
    %v1321 = vadd.f32 %v1296, %v1312
    %vm1322 = vcmp.gt.f32.partialorder %v1316, 0.0
    %vm1323 = vcmp.gt.f32.partialorder %v1317, 0.0
    %vm1324 = vcmp.gt.f32.partialorder %v1318, 0.0
    %vm1325 = vcmp.gt.f32.partialorder %v1319, 0.0
    %vm1326 = vcmp.gt.f32.partialorder %v1320, 0.0
    %vm1327 = vcmp.gt.f32.partialorder %v1321, 0.0
    %v1328 = vmul.f32 %v1316, 0.01
    %v1329 = vmul.f32 %v1317, 0.01
    %v1330 = vmul.f32 %v1318, 0.01
    %v1331 = vmul.f32 %v1319, 0.01
    %v1332 = vmul.f32 %v1320, 0.01
    %v1333 = vmul.f32 %v1321, 0.01
    %v1334 = vsel %vm1322, %v1316, %v1328
    %v1335 = vsel %vm1323, %v1317, %v1329
    %v1336 = vsel %vm1324, %v1318, %v1330
    %v1337 = vsel %vm1325, %v1319, %v1331
    %v1338 = vsel %vm1326, %v1320, %v1332
    %v1339 = vsel %vm1327, %v1321, %v1333
    %v1340 = vpack.c.bf16 %v1337, %v1334
    %v1341 = vpack.c.bf16 %v1338, %v1335
    %v1342 = vpack.c.bf16 %v1339, %v1336
    %v1346 = vunpack.c.l.b16 %v1340
    %v1347 = vunpack.c.l.b16 %v1341
    %v1348 = vunpack.c.l.b16 %v1342
    %v1349 = vunpack.c.h.b16 %v1340
    %v1350 = vunpack.c.h.b16 %v1341
    %v1351 = vunpack.c.h.b16 %v1342
    %v1352 = vpack.c.b16 %v1347, %v1346
    %v1353 = vpack.c.b16 %v1348, %v1348
    %v1354 = vpack.c.b16 %v1350, %v1349
    %v1355 = vpack.c.b16 %v1351, %v1351
    %1360 = vst [vmem:[#allocation16] sm:$0xff] %v1352
    %vm1361 = vcmask 355328
    %1362 = vst.msk [vmem:[#allocation16 + $0x8] sm:$0xf] %vm1361, %v1353
    %1363 = vst [vmem:[#allocation16 + $0xc] sm:$0xff] %v1354
    %1364 = vst.msk [vmem:[#allocation16 + $0x14] sm:$0xf] %vm1361, %v1355
    %v1365 = vld [vmem:[%s6] sm:$0x7]
    %v1367 = vlaneseq
    %v1368 = vshrl.u32 %v1367, 7
    %v1369 = vsub.s32 0, %v1368
    %v1370 = vrot.slane %v1365, %v1369
    %v1371 = vlaneseq
    %v1372 = vshrl.u32 %v1371, 7
    %v1373 = vsub.s32 1, %v1372
    %v1374 = vrot.slane %v1365, %v1373
    %v1375 = vlaneseq
    %v1376 = vshrl.u32 %v1375, 7
    %v1377 = vsub.s32 2, %v1376
    %v1378 = vrot.slane %v1365, %v1377
    %v1382 = vmul.f32 %v1334, %v1370
    %v1383 = vmul.f32 %v1335, %v1374
    %v1384 = vmul.f32 %v1336, %v1378
    %v1385 = vmul.f32 %v1337, %v1370
    %v1386 = vmul.f32 %v1338, %v1374
    %v1387 = vmul.f32 %v1339, %v1378
    %v1388 = vadd.f32 %v1382, %v1383
    %v1389 = vsel %vm636, %v1384, 0.0
    %v1390 = vadd.f32 %v1388, %v1389
    %1391 = vadd.xlane.f32.xlu0 %v1390
    %v1392 = vpop.xlane.xlu0 %1391
    %v1393 = vadd.f32 %v1385, %v1386
    %v1394 = vsel %vm636, %v1387, 0.0
    %v1395 = vadd.f32 %v1393, %v1394
    %1396 = vadd.xlane.f32.xlu0 %v1395
    %v1397 = vpop.xlane.xlu0 %1396
    %s1398 = sld [smem:[#allocation15]]
    %v1399 = vstv %s1398
    %v1400 = vadd.f32 %v1392, %v1399
    %v1401 = vadd.f32 %v1397, %v1399
    %v1404 = vlaneseq
    %v1405 = vand.u32 %v1404, 127
    %v1406 = vlaneseq
    %v1407 = vshrl.u32 %v1406, 7
    %v1408 = vsub.s32 %v1405, %v1407
    %v1409 = vrot.slane %v1400, %v1408
    %v1410 = vadd.s32 %v1405, 4294967288
    %v1411 = vlaneseq
    %v1412 = vshrl.u32 %v1411, 7
    %v1413 = vsub.s32 %v1410, %v1412
    %v1414 = vrot.slane %v1401, %v1413
    %vm1415 = vcmask 130112
    %v1416 = vsel %vm1415, %v1414, %v1409
    %vm1418 = vcmask 122880
    %1419 = vst.msk [vmem:[%s12] sm:$0x1] %vm1418, %v1416
    %v1420 = vld [vmem:[#allocation12] sm:$0xff]
    %v1421 = vld [vmem:[#allocation12 + $0x8] sm:$0xf]
    %v1422 = vld [vmem:[#allocation12 + $0xc] sm:$0xff]
    %v1423 = vld [vmem:[#allocation12 + $0x14] sm:$0xf]
    %v1424 = vld [vmem:[#allocation12 + $0x18] sm:$0xff]
    %v1425 = vld [vmem:[#allocation12 + $0x20] sm:$0xf]
    %v1426 = vld [vmem:[#allocation12 + $0x24] sm:$0xff]
    %v1427 = vld [vmem:[#allocation12 + $0x2c] sm:$0xf]
    %v1428 = vld [vmem:[#allocation12 + $0x30] sm:$0xff]
    %v1429 = vld [vmem:[#allocation12 + $0x38] sm:$0xf]
    %v1430 = vld [vmem:[#allocation12 + $0x3c] sm:$0xff]
    %v1431 = vld [vmem:[#allocation12 + $0x44] sm:$0xf]
    %v1432 = vld [vmem:[#allocation12 + $0x48] sm:$0xff]
    %v1433 = vld [vmem:[#allocation12 + $0x50] sm:$0xf]
    %v1434 = vld [vmem:[#allocation12 + $0x54] sm:$0xff]
    %v1435 = vld [vmem:[#allocation12 + $0x5c] sm:$0xf]
    %v1436 = vld [vmem:[#allocation12 + $0x60] sm:$0xff]
    %v1437 = vld [vmem:[#allocation12 + $0x68] sm:$0xf]
    %v1438 = vld [vmem:[#allocation12 + $0x6c] sm:$0xff]
    %v1439 = vld [vmem:[#allocation12 + $0x74] sm:$0xf]
    %v1440 = vld [vmem:[#allocation12 + $0x78] sm:$0xff]
    %v1441 = vld [vmem:[#allocation12 + $0x80] sm:$0xf]
    %v1442 = vld [vmem:[#allocation12 + $0x84] sm:$0xff]
    %v1443 = vld [vmem:[#allocation12 + $0x8c] sm:$0xf]
    %v1444 = vld [vmem:[#allocation12 + $0x90] sm:$0xff]
    %v1445 = vld [vmem:[#allocation12 + $0x98] sm:$0xf]
    %v1446 = vld [vmem:[#allocation12 + $0x9c] sm:$0xff]
    %v1447 = vld [vmem:[#allocation12 + $0xa4] sm:$0xf]
    %v1448 = vld [vmem:[#allocation12 + $0xa8] sm:$0xff]
    %v1449 = vld [vmem:[#allocation12 + $0xb0] sm:$0xf]
    %v1450 = vld [vmem:[#allocation12 + $0xb4] sm:$0xff]
    %v1451 = vld [vmem:[#allocation12 + $0xbc] sm:$0xf]
    %v1452 = vld [vmem:[#allocation12 + $0xc0] sm:$0xff]
    %v1453 = vld [vmem:[#allocation12 + $0xc8] sm:$0xf]
    %v1454 = vld [vmem:[#allocation12 + $0xcc] sm:$0xff]
    %v1455 = vld [vmem:[#allocation12 + $0xd4] sm:$0xf]
    %v1456 = vld [vmem:[#allocation12 + $0xd8] sm:$0xff]
    %v1457 = vld [vmem:[#allocation12 + $0xe0] sm:$0xf]
    %v1458 = vld [vmem:[#allocation12 + $0xe4] sm:$0xff]
    %v1459 = vld [vmem:[#allocation12 + $0xec] sm:$0xf]
    %v1460 = vld [vmem:[#allocation12 + $0xf0] sm:$0xff]
    %v1461 = vld [vmem:[#allocation12 + $0xf8] sm:$0xf]
    %v1462 = vld [vmem:[#allocation12 + $0xfc] sm:$0xff]
    %v1463 = vld [vmem:[#allocation12 + $0x104] sm:$0xf]
    %v1464 = vld [vmem:[#allocation12 + $0x108] sm:$0xff]
    %v1465 = vld [vmem:[#allocation12 + $0x110] sm:$0xf]
    %v1466 = vld [vmem:[#allocation12 + $0x114] sm:$0xff]
    %v1467 = vld [vmem:[#allocation12 + $0x11c] sm:$0xf]
    %v1468 = vld [vmem:[#allocation12 + $0x120] sm:$0xff]
    %v1469 = vld [vmem:[#allocation12 + $0x128] sm:$0xf]
    %v1470 = vld [vmem:[#allocation12 + $0x12c] sm:$0xff]
    %v1471 = vld [vmem:[#allocation12 + $0x134] sm:$0xf]
    %v1472 = vld [vmem:[#allocation12 + $0x138] sm:$0xff]
    %v1473 = vld [vmem:[#allocation12 + $0x140] sm:$0xf]
    %v1474 = vld [vmem:[#allocation12 + $0x144] sm:$0xff]
    %v1475 = vld [vmem:[#allocation12 + $0x14c] sm:$0xf]
    %v1476 = vld [vmem:[#allocation12 + $0x150] sm:$0xff]
    %v1477 = vld [vmem:[#allocation12 + $0x158] sm:$0xf]
    %v1478 = vld [vmem:[#allocation12 + $0x15c] sm:$0xff]
    %v1479 = vld [vmem:[#allocation12 + $0x164] sm:$0xf]
    %v1480 = vld [vmem:[#allocation12 + $0x168] sm:$0xff]
    %v1481 = vld [vmem:[#allocation12 + $0x170] sm:$0xf]
    %v1482 = vld [vmem:[#allocation12 + $0x174] sm:$0xff]
    %v1483 = vld [vmem:[#allocation12 + $0x17c] sm:$0xf]
    %v1484 = vld [vmem:[#allocation12 + $0x180] sm:$0xff]
    %v1485 = vld [vmem:[#allocation12 + $0x188] sm:$0xf]
    %v1486 = vld [vmem:[#allocation12 + $0x18c] sm:$0xff]
    %v1487 = vld [vmem:[#allocation12 + $0x194] sm:$0xf]
    %v1488 = vld [vmem:[#allocation12 + $0x198] sm:$0xff]
    %v1489 = vld [vmem:[#allocation12 + $0x1a0] sm:$0xf]
    %v1490 = vld [vmem:[#allocation12 + $0x1a4] sm:$0xff]
    %v1491 = vld [vmem:[#allocation12 + $0x1ac] sm:$0xf]
    %v1492 = vld [vmem:[#allocation12 + $0x1b0] sm:$0xff]
    %v1493 = vld [vmem:[#allocation12 + $0x1b8] sm:$0xf]
    %v1494 = vld [vmem:[#allocation12 + $0x1bc] sm:$0x33]
    %v1495 = vld [vmem:[#allocation12 + $0x1c4] sm:$0x3]
    %v1496 = vld [vmem:[#allocation14] sm:$0xff]
    %v1497 = vld [vmem:[#allocation14 + $0x8] sm:$0xf]
    %v1498 = vld [vmem:[#allocation14 + $0xc] sm:$0xff]
    %v1499 = vld [vmem:[#allocation14 + $0x14] sm:$0xf]
    %v1500 = vld [vmem:[#allocation14 + $0x18] sm:$0xff]
    %v1501 = vld [vmem:[#allocation14 + $0x20] sm:$0xf]
    %v1502 = vld [vmem:[#allocation14 + $0x24] sm:$0xff]
    %v1503 = vld [vmem:[#allocation14 + $0x2c] sm:$0xf]
    %v1504 = vld [vmem:[#allocation14 + $0x30] sm:$0xff]
    %v1505 = vld [vmem:[#allocation14 + $0x38] sm:$0xf]
    %v1506 = vld [vmem:[#allocation14 + $0x3c] sm:$0xff]
    %v1507 = vld [vmem:[#allocation14 + $0x44] sm:$0xf]
    %v1508 = vld [vmem:[#allocation14 + $0x48] sm:$0xff]
    %v1509 = vld [vmem:[#allocation14 + $0x50] sm:$0xf]
    %v1510 = vld [vmem:[#allocation14 + $0x54] sm:$0xff]
    %v1511 = vld [vmem:[#allocation14 + $0x5c] sm:$0xf]
    %v1512 = vld [vmem:[#allocation14 + $0x60] sm:$0xff]
    %v1513 = vld [vmem:[#allocation14 + $0x68] sm:$0xf]
    %v1514 = vld [vmem:[#allocation14 + $0x6c] sm:$0xff]
    %v1515 = vld [vmem:[#allocation14 + $0x74] sm:$0xf]
    %v1516 = vld [vmem:[#allocation14 + $0x78] sm:$0xff]
    %v1517 = vld [vmem:[#allocation14 + $0x80] sm:$0xf]
    %v1518 = vld [vmem:[#allocation14 + $0x84] sm:$0xff]
    %v1519 = vld [vmem:[#allocation14 + $0x8c] sm:$0xf]
    %v1520 = vld [vmem:[#allocation14 + $0x90] sm:$0xff]
    %v1521 = vld [vmem:[#allocation14 + $0x98] sm:$0xf]
    %v1522 = vld [vmem:[#allocation14 + $0x9c] sm:$0xff]
    %v1523 = vld [vmem:[#allocation14 + $0xa4] sm:$0xf]
    %v1524 = vld [vmem:[#allocation14 + $0xa8] sm:$0xff]
    %v1525 = vld [vmem:[#allocation14 + $0xb0] sm:$0xf]
    %v1526 = vld [vmem:[#allocation14 + $0xb4] sm:$0xff]
    %v1527 = vld [vmem:[#allocation14 + $0xbc] sm:$0xf]
    %v1528 = vld [vmem:[#allocation14 + $0xc0] sm:$0xff]
    %v1529 = vld [vmem:[#allocation14 + $0xc8] sm:$0xf]
    %v1530 = vld [vmem:[#allocation14 + $0xcc] sm:$0xff]
    %v1531 = vld [vmem:[#allocation14 + $0xd4] sm:$0xf]
    %v1532 = vld [vmem:[#allocation14 + $0xd8] sm:$0xff]
    %v1533 = vld [vmem:[#allocation14 + $0xe0] sm:$0xf]
    %v1534 = vld [vmem:[#allocation14 + $0xe4] sm:$0xff]
    %v1535 = vld [vmem:[#allocation14 + $0xec] sm:$0xf]
    %v1536 = vld [vmem:[#allocation14 + $0xf0] sm:$0xff]
    %v1537 = vld [vmem:[#allocation14 + $0xf8] sm:$0xf]
    %v1538 = vld [vmem:[#allocation14 + $0xfc] sm:$0xff]
    %v1539 = vld [vmem:[#allocation14 + $0x104] sm:$0xf]
    %v1540 = vld [vmem:[#allocation14 + $0x108] sm:$0xff]
    %v1541 = vld [vmem:[#allocation14 + $0x110] sm:$0xf]
    %v1542 = vld [vmem:[#allocation14 + $0x114] sm:$0xff]
    %v1543 = vld [vmem:[#allocation14 + $0x11c] sm:$0xf]
    %v1544 = vld [vmem:[#allocation14 + $0x120] sm:$0xff]
    %v1545 = vld [vmem:[#allocation14 + $0x128] sm:$0xf]
    %v1546 = vld [vmem:[#allocation14 + $0x12c] sm:$0xff]
    %v1547 = vld [vmem:[#allocation14 + $0x134] sm:$0xf]
    %v1548 = vld [vmem:[#allocation14 + $0x138] sm:$0xff]
    %v1549 = vld [vmem:[#allocation14 + $0x140] sm:$0xf]
    %v1550 = vld [vmem:[#allocation14 + $0x144] sm:$0xff]
    %v1551 = vld [vmem:[#allocation14 + $0x14c] sm:$0xf]
    %v1552 = vld [vmem:[#allocation14 + $0x150] sm:$0xff]
    %v1553 = vld [vmem:[#allocation14 + $0x158] sm:$0xf]
    %v1554 = vld [vmem:[#allocation14 + $0x15c] sm:$0xff]
    %v1555 = vld [vmem:[#allocation14 + $0x164] sm:$0xf]
    %v1556 = vld [vmem:[#allocation14 + $0x168] sm:$0xff]
    %v1557 = vld [vmem:[#allocation14 + $0x170] sm:$0xf]
    %v1558 = vld [vmem:[#allocation14 + $0x174] sm:$0xff]
    %v1559 = vld [vmem:[#allocation14 + $0x17c] sm:$0xf]
    %v1560 = vld [vmem:[#allocation14 + $0x180] sm:$0xff]
    %v1561 = vld [vmem:[#allocation14 + $0x188] sm:$0xf]
    %v1562 = vld [vmem:[#allocation14 + $0x18c] sm:$0xff]
    %v1563 = vld [vmem:[#allocation14 + $0x194] sm:$0xf]
    %v1564 = vld [vmem:[#allocation14 + $0x198] sm:$0xff]
    %v1565 = vld [vmem:[#allocation14 + $0x1a0] sm:$0xf]
    %v1566 = vld [vmem:[#allocation14 + $0x1a4] sm:$0xff]
    %v1567 = vld [vmem:[#allocation14 + $0x1ac] sm:$0xf]
    %v1568 = vld [vmem:[#allocation14 + $0x1b0] sm:$0xff]
    %v1569 = vld [vmem:[#allocation14 + $0x1b8] sm:$0xf]
    %v1570 = vld [vmem:[#allocation14 + $0x1bc] sm:$0x33]
    %v1571 = vld [vmem:[#allocation14 + $0x1c4] sm:$0x3]
    %v1648 = vunpack.c.l.b16 %v1496
    %v1649 = vunpack.c.h.b16 %v1496
    %v1650 = vunpack.c.l.b16 %v1497
    %v1651 = vunpack.c.l.b16 %v1498
    %v1652 = vunpack.c.h.b16 %v1498
    %v1653 = vunpack.c.l.b16 %v1499
    %v1654 = vunpack.c.l.b16 %v1500
    %v1655 = vunpack.c.h.b16 %v1500
    %v1656 = vunpack.c.l.b16 %v1501
    %v1657 = vunpack.c.l.b16 %v1502
    %v1658 = vunpack.c.h.b16 %v1502
    %v1659 = vunpack.c.l.b16 %v1503
    %v1660 = vunpack.c.l.b16 %v1504
    %v1661 = vunpack.c.h.b16 %v1504
    %v1662 = vunpack.c.l.b16 %v1505
    %v1663 = vunpack.c.l.b16 %v1506
    %v1664 = vunpack.c.h.b16 %v1506
    %v1665 = vunpack.c.l.b16 %v1507
    %v1666 = vunpack.c.l.b16 %v1508
    %v1667 = vunpack.c.h.b16 %v1508
    %v1668 = vunpack.c.l.b16 %v1509
    %v1669 = vunpack.c.l.b16 %v1510
    %v1670 = vunpack.c.h.b16 %v1510
    %v1671 = vunpack.c.l.b16 %v1511
    %v1672 = vunpack.c.l.b16 %v1512
    %v1673 = vunpack.c.h.b16 %v1512
    %v1674 = vunpack.c.l.b16 %v1513
    %v1675 = vunpack.c.l.b16 %v1514
    %v1676 = vunpack.c.h.b16 %v1514
    %v1677 = vunpack.c.l.b16 %v1515
    %v1678 = vunpack.c.l.b16 %v1516
    %v1679 = vunpack.c.h.b16 %v1516
    %v1680 = vunpack.c.l.b16 %v1517
    %v1681 = vunpack.c.l.b16 %v1518
    %v1682 = vunpack.c.h.b16 %v1518
    %v1683 = vunpack.c.l.b16 %v1519
    %v1684 = vunpack.c.l.b16 %v1520
    %v1685 = vunpack.c.h.b16 %v1520
    %v1686 = vunpack.c.l.b16 %v1521
    %v1687 = vunpack.c.l.b16 %v1522
    %v1688 = vunpack.c.h.b16 %v1522
    %v1689 = vunpack.c.l.b16 %v1523
    %v1690 = vunpack.c.l.b16 %v1524
    %v1691 = vunpack.c.h.b16 %v1524
    %v1692 = vunpack.c.l.b16 %v1525
    %v1693 = vunpack.c.l.b16 %v1526
    %v1694 = vunpack.c.h.b16 %v1526
    %v1695 = vunpack.c.l.b16 %v1527
    %v1696 = vunpack.c.l.b16 %v1528
    %v1697 = vunpack.c.h.b16 %v1528
    %v1698 = vunpack.c.l.b16 %v1529
    %v1699 = vunpack.c.l.b16 %v1530
    %v1700 = vunpack.c.h.b16 %v1530
    %v1701 = vunpack.c.l.b16 %v1531
    %v1702 = vunpack.c.l.b16 %v1532
    %v1703 = vunpack.c.h.b16 %v1532
    %v1704 = vunpack.c.l.b16 %v1533
    %v1705 = vunpack.c.l.b16 %v1534
    %v1706 = vunpack.c.h.b16 %v1534
    %v1707 = vunpack.c.l.b16 %v1535
    %v1708 = vunpack.c.l.b16 %v1536
    %v1709 = vunpack.c.h.b16 %v1536
    %v1710 = vunpack.c.l.b16 %v1537
    %v1711 = vunpack.c.l.b16 %v1538
    %v1712 = vunpack.c.h.b16 %v1538
    %v1713 = vunpack.c.l.b16 %v1539
    %v1714 = vunpack.c.l.b16 %v1540
    %v1715 = vunpack.c.h.b16 %v1540
    %v1716 = vunpack.c.l.b16 %v1541
    %v1717 = vunpack.c.l.b16 %v1542
    %v1718 = vunpack.c.h.b16 %v1542
    %v1719 = vunpack.c.l.b16 %v1543
    %v1720 = vunpack.c.l.b16 %v1544
    %v1721 = vunpack.c.h.b16 %v1544
    %v1722 = vunpack.c.l.b16 %v1545
    %v1723 = vunpack.c.l.b16 %v1546
    %v1724 = vunpack.c.h.b16 %v1546
    %v1725 = vunpack.c.l.b16 %v1547
    %v1726 = vunpack.c.l.b16 %v1548
    %v1727 = vunpack.c.h.b16 %v1548
    %v1728 = vunpack.c.l.b16 %v1549
    %v1729 = vunpack.c.l.b16 %v1550
    %v1730 = vunpack.c.h.b16 %v1550
    %v1731 = vunpack.c.l.b16 %v1551
    %v1732 = vunpack.c.l.b16 %v1552
    %v1733 = vunpack.c.h.b16 %v1552
    %v1734 = vunpack.c.l.b16 %v1553
    %v1735 = vunpack.c.l.b16 %v1554
    %v1736 = vunpack.c.h.b16 %v1554
    %v1737 = vunpack.c.l.b16 %v1555
    %v1738 = vunpack.c.l.b16 %v1556
    %v1739 = vunpack.c.h.b16 %v1556
    %v1740 = vunpack.c.l.b16 %v1557
    %v1741 = vunpack.c.l.b16 %v1558
    %v1742 = vunpack.c.h.b16 %v1558
    %v1743 = vunpack.c.l.b16 %v1559
    %v1744 = vunpack.c.l.b16 %v1560
    %v1745 = vunpack.c.h.b16 %v1560
    %v1746 = vunpack.c.l.b16 %v1561
    %v1747 = vunpack.c.l.b16 %v1562
    %v1748 = vunpack.c.h.b16 %v1562
    %v1749 = vunpack.c.l.b16 %v1563
    %v1750 = vunpack.c.l.b16 %v1564
    %v1751 = vunpack.c.h.b16 %v1564
    %v1752 = vunpack.c.l.b16 %v1565
    %v1753 = vunpack.c.l.b16 %v1566
    %v1754 = vunpack.c.h.b16 %v1566
    %v1755 = vunpack.c.l.b16 %v1567
    %v1756 = vunpack.c.l.b16 %v1568
    %v1757 = vunpack.c.h.b16 %v1568
    %v1758 = vunpack.c.l.b16 %v1569
    %v1759 = vunpack.c.l.b16 %v1570
    %v1760 = vunpack.c.h.b16 %v1570
    %v1761 = vunpack.c.l.b16 %v1571
    %v1762 = vpack.c.b16 %v1651, %v1648
    %v1763 = vpack.c.b16 %v1652, %v1649
    %v1764 = vpack.c.b16 %v1653, %v1650
    %v1765 = vpack.c.b16 %v1657, %v1654
    %v1766 = vpack.c.b16 %v1658, %v1655
    %v1767 = vpack.c.b16 %v1659, %v1656
    %v1768 = vpack.c.b16 %v1663, %v1660
    %v1769 = vpack.c.b16 %v1664, %v1661
    %v1770 = vpack.c.b16 %v1665, %v1662
    %v1771 = vpack.c.b16 %v1669, %v1666
    %v1772 = vpack.c.b16 %v1670, %v1667
    %v1773 = vpack.c.b16 %v1671, %v1668
    %v1774 = vpack.c.b16 %v1675, %v1672
    %v1775 = vpack.c.b16 %v1676, %v1673
    %v1776 = vpack.c.b16 %v1677, %v1674
    %v1777 = vpack.c.b16 %v1681, %v1678
    %v1778 = vpack.c.b16 %v1682, %v1679
    %v1779 = vpack.c.b16 %v1683, %v1680
    %v1780 = vpack.c.b16 %v1687, %v1684
    %v1781 = vpack.c.b16 %v1688, %v1685
    %v1782 = vpack.c.b16 %v1689, %v1686
    %v1783 = vpack.c.b16 %v1693, %v1690
    %v1784 = vpack.c.b16 %v1694, %v1691
    %v1785 = vpack.c.b16 %v1695, %v1692
    %v1786 = vpack.c.b16 %v1699, %v1696
    %v1787 = vpack.c.b16 %v1700, %v1697
    %v1788 = vpack.c.b16 %v1701, %v1698
    %v1789 = vpack.c.b16 %v1705, %v1702
    %v1790 = vpack.c.b16 %v1706, %v1703
    %v1791 = vpack.c.b16 %v1707, %v1704
    %v1792 = vpack.c.b16 %v1711, %v1708
    %v1793 = vpack.c.b16 %v1712, %v1709
    %v1794 = vpack.c.b16 %v1713, %v1710
    %v1795 = vpack.c.b16 %v1717, %v1714
    %v1796 = vpack.c.b16 %v1718, %v1715
    %v1797 = vpack.c.b16 %v1719, %v1716
    %v1798 = vpack.c.b16 %v1723, %v1720
    %v1799 = vpack.c.b16 %v1724, %v1721
    %v1800 = vpack.c.b16 %v1725, %v1722
    %v1801 = vpack.c.b16 %v1729, %v1726
    %v1802 = vpack.c.b16 %v1730, %v1727
    %v1803 = vpack.c.b16 %v1731, %v1728
    %v1804 = vpack.c.b16 %v1735, %v1732
    %v1805 = vpack.c.b16 %v1736, %v1733
    %v1806 = vpack.c.b16 %v1737, %v1734
    %v1807 = vpack.c.b16 %v1741, %v1738
    %v1808 = vpack.c.b16 %v1742, %v1739
    %v1809 = vpack.c.b16 %v1743, %v1740
    %v1810 = vpack.c.b16 %v1747, %v1744
    %v1811 = vpack.c.b16 %v1748, %v1745
    %v1812 = vpack.c.b16 %v1749, %v1746
    %v1813 = vpack.c.b16 %v1753, %v1750
    %v1814 = vpack.c.b16 %v1754, %v1751
    %v1815 = vpack.c.b16 %v1755, %v1752
    %v1816 = vpack.c.b16 %v1759, %v1756
    %v1817 = vpack.c.b16 %v1760, %v1757
    %v1818 = vpack.c.b16 %v1761, %v1758
    %v1874 = vsel %vm640, %v1816, 0
    %v1877 = vsel %vm640, %v1817, 0
    %v1880 = vsel %vm640, %v1818, 0
    %1882 = vmatprep.subr.bf16.mxu0 %v1784
    %1883 = vmatpush1.bf16.msra.mxu0 %v1783
    %1884 = vmatprep.subr.bf16.mxu0 %v1781
    %1885 = vmatpush1.bf16.msra.mxu0 %v1780
    %1886 = vmatprep.subr.bf16.mxu0 %v1778
    %1887 = vmatpush1.bf16.msra.mxu0 %v1777
    %1888 = vmatprep.subr.bf16.mxu0 %v1775
    %1889 = vmatpush1.bf16.msra.mxu0 %v1774
    %1890 = vmatprep.subr.bf16.mxu0 %v1772
    %1891 = vmatpush1.bf16.msra.mxu0 %v1771
    %1892 = vmatprep.subr.bf16.mxu0 %v1769
    %1893 = vmatpush1.bf16.msra.mxu0 %v1768
    %1894 = vmatprep.subr.bf16.mxu0 %v1766
    %1895 = vmatpush1.bf16.msra.mxu0 %v1765
    %1896 = vmatprep.subr.bf16.mxu0 %v1763
    %1897 = vmatpush1.bf16.msra.mxu0 %v1762
    %1898 = vmatprep.subr.bf16.mxu0 %v1808
    %1899 = vmatpush2.bf16.msra.mxu0 %v1807
    %1900 = vmatprep.subr.bf16.mxu0 %v1805
    %1901 = vmatpush2.bf16.msra.mxu0 %v1804
    %1902 = vmatprep.subr.bf16.mxu0 %v1802
    %1903 = vmatpush2.bf16.msra.mxu0 %v1801
    %1904 = vmatprep.subr.bf16.mxu0 %v1799
    %1905 = vmatpush2.bf16.msra.mxu0 %v1798
    %1906 = vmatprep.subr.bf16.mxu0 %v1796
    %1907 = vmatpush2.bf16.msra.mxu0 %v1795
    %1908 = vmatprep.subr.bf16.mxu0 %v1793
    %1909 = vmatpush2.bf16.msra.mxu0 %v1792
    %1910 = vmatprep.subr.bf16.mxu0 %v1790
    %1911 = vmatpush2.bf16.msra.mxu0 %v1789
    %1912 = vmatprep.subr.bf16.mxu0 %v1787
    %1913 = vmatpush2.bf16.msra.mxu0 %v1786
    %1914 = vmatprep.mubr.bf16.mxu0 %v181
    %1915 = vmatmul.mubr.bf16.gmra.mxu0 %v180
    %v1916 = vpop.f32.mrf.mxu0
    %v1917 = vadd.f32 0.0, %v1916
    %v1918 = vpop.f32.mrf.mxu0
    %v1919 = vadd.f32 0.0, %v1918
    %v1920 = vpop.f32.mrf.mxu0
    %v1921 = vadd.f32 0.0, %v1920
    %v1922 = vpop.f32.mrf.mxu0
    %v1923 = vadd.f32 0.0, %v1922
    %1924 = vdwg.mxu0
    %1925 = vmatprep.subr.bf16.mxu0 0
    %1926 = vmatpush1.bf16.msra.mxu0 0
    %1927 = vmatprep.subr.bf16.mxu0 0
    %1928 = vmatpush1.bf16.msra.mxu0 0
    %1929 = vmatprep.subr.bf16.mxu0 0
    %1930 = vmatpush1.bf16.msra.mxu0 0
    %1931 = vmatprep.subr.bf16.mxu0 0
    %1932 = vmatpush1.bf16.msra.mxu0 0
    %1933 = vmatprep.subr.bf16.mxu0 0
    %1934 = vmatpush1.bf16.msra.mxu0 0
    %1935 = vmatprep.subr.bf16.mxu0 %v1877
    %1936 = vmatpush1.bf16.msra.mxu0 %v1874
    %1937 = vmatprep.subr.bf16.mxu0 %v1814
    %1938 = vmatpush1.bf16.msra.mxu0 %v1813
    %1939 = vmatprep.subr.bf16.mxu0 %v1811
    %1940 = vmatpush1.bf16.msra.mxu0 %v1810
    %1941 = vmatprep.subr.bf16.mxu0 0
    %1942 = vmatpush2.bf16.msra.mxu0 0
    %1943 = vmatprep.subr.bf16.mxu0 0
    %1944 = vmatpush2.bf16.msra.mxu0 0
    %1945 = vmatprep.subr.bf16.mxu0 0
    %1946 = vmatpush2.bf16.msra.mxu0 0
    %1947 = vmatprep.subr.bf16.mxu0 0
    %1948 = vmatpush2.bf16.msra.mxu0 0
    %1949 = vmatprep.subr.bf16.mxu0 0
    %1950 = vmatpush2.bf16.msra.mxu0 0
    %1951 = vmatprep.subr.bf16.mxu0 0
    %1952 = vmatpush2.bf16.msra.mxu0 0
    %1953 = vmatprep.subr.bf16.mxu0 0
    %1954 = vmatpush2.bf16.msra.mxu0 0
    %1955 = vmatprep.subr.bf16.mxu0 0
    %1956 = vmatpush2.bf16.msra.mxu0 0
    %1957 = vmatprep.mubr.bf16.mxu0 0
    %1958 = vmatmul.mubr.bf16.gmra.mxu0 %v638
    %v1959 = vpop.f32.mrf.mxu0
    %v1960 = vadd.f32 %v1917, %v1959
    %v1961 = vpop.f32.mrf.mxu0
    %v1962 = vadd.f32 %v1919, %v1961
    %v1963 = vpop.f32.mrf.mxu0
    %v1964 = vadd.f32 %v1921, %v1963
    %v1965 = vpop.f32.mrf.mxu0
    %v1966 = vadd.f32 %v1923, %v1965
    %1967 = vdwg.mxu0
    %1968 = vmatprep.subr.bf16.mxu0 0
    %1969 = vmatpush1.bf16.msra.mxu0 %v1785
    %1970 = vmatprep.subr.bf16.mxu0 0
    %1971 = vmatpush1.bf16.msra.mxu0 %v1782
    %1972 = vmatprep.subr.bf16.mxu0 0
    %1973 = vmatpush1.bf16.msra.mxu0 %v1779
    %1974 = vmatprep.subr.bf16.mxu0 0
    %1975 = vmatpush1.bf16.msra.mxu0 %v1776
    %1976 = vmatprep.subr.bf16.mxu0 0
    %1977 = vmatpush1.bf16.msra.mxu0 %v1773
    %1978 = vmatprep.subr.bf16.mxu0 0
    %1979 = vmatpush1.bf16.msra.mxu0 %v1770
    %1980 = vmatprep.subr.bf16.mxu0 0
    %1981 = vmatpush1.bf16.msra.mxu0 %v1767
    %1982 = vmatprep.subr.bf16.mxu0 0
    %1983 = vmatpush1.bf16.msra.mxu0 %v1764
    %1984 = vmatprep.subr.bf16.mxu0 0
    %1985 = vmatpush2.bf16.msra.mxu0 %v1809
    %1986 = vmatprep.subr.bf16.mxu0 0
    %1987 = vmatpush2.bf16.msra.mxu0 %v1806
    %1988 = vmatprep.subr.bf16.mxu0 0
    %1989 = vmatpush2.bf16.msra.mxu0 %v1803
    %1990 = vmatprep.subr.bf16.mxu0 0
    %1991 = vmatpush2.bf16.msra.mxu0 %v1800
    %1992 = vmatprep.subr.bf16.mxu0 0
    %1993 = vmatpush2.bf16.msra.mxu0 %v1797
    %1994 = vmatprep.subr.bf16.mxu0 0
    %1995 = vmatpush2.bf16.msra.mxu0 %v1794
    %1996 = vmatprep.subr.bf16.mxu0 0
    %1997 = vmatpush2.bf16.msra.mxu0 %v1791
    %1998 = vmatprep.subr.bf16.mxu0 0
    %1999 = vmatpush2.bf16.msra.mxu0 %v1788
    %2000 = vmatprep.mubr.bf16.mxu0 %v181
    %2001 = vmatmul.mubr.bf16.gmra.mxu0 %v180
    %v2002 = vpop.f32.mrf.mxu0
    %v2003 = vadd.f32 0.0, %v2002
    %v2004 = vpop.f32.mrf.mxu0
    %v2005 = vpop.f32.mrf.mxu0
    %v2006 = vadd.f32 0.0, %v2005
    %v2007 = vpop.f32.mrf.mxu0
    %2008 = vdwg.mxu0
    %2009 = vmatprep.subr.bf16.mxu0 0
    %2010 = vmatpush1.bf16.msra.mxu0 0
    %2011 = vmatprep.subr.bf16.mxu0 0
    %2012 = vmatpush1.bf16.msra.mxu0 0
    %2013 = vmatprep.subr.bf16.mxu0 0
    %2014 = vmatpush1.bf16.msra.mxu0 0
    %2015 = vmatprep.subr.bf16.mxu0 0
    %2016 = vmatpush1.bf16.msra.mxu0 0
    %2017 = vmatprep.subr.bf16.mxu0 0
    %2018 = vmatpush1.bf16.msra.mxu0 0
    %2019 = vmatprep.subr.bf16.mxu0 0
    %2020 = vmatpush1.bf16.msra.mxu0 %v1880
    %2021 = vmatprep.subr.bf16.mxu0 0
    %2022 = vmatpush1.bf16.msra.mxu0 %v1815
    %2023 = vmatprep.subr.bf16.mxu0 0
    %2024 = vmatpush1.bf16.msra.mxu0 %v1812
    %2025 = vmatprep.subr.bf16.mxu0 0
    %2026 = vmatpush2.bf16.msra.mxu0 0
    %2027 = vmatprep.subr.bf16.mxu0 0
    %2028 = vmatpush2.bf16.msra.mxu0 0
    %2029 = vmatprep.subr.bf16.mxu0 0
    %2030 = vmatpush2.bf16.msra.mxu0 0
    %2031 = vmatprep.subr.bf16.mxu0 0
    %2032 = vmatpush2.bf16.msra.mxu0 0
    %2033 = vmatprep.subr.bf16.mxu0 0
    %2034 = vmatpush2.bf16.msra.mxu0 0
    %2035 = vmatprep.subr.bf16.mxu0 0
    %2036 = vmatpush2.bf16.msra.mxu0 0
    %2037 = vmatprep.subr.bf16.mxu0 0
    %2038 = vmatpush2.bf16.msra.mxu0 0
    %2039 = vmatprep.subr.bf16.mxu0 0
    %2040 = vmatpush2.bf16.msra.mxu0 0
    %2041 = vmatprep.mubr.bf16.mxu0 0
    %2042 = vmatmul.mubr.bf16.gmra.mxu0 %v638
    %v2043 = vpop.f32.mrf.mxu0
    %v2044 = vadd.f32 %v2003, %v2043
    %v2045 = vpop.f32.mrf.mxu0
    %v2046 = vpop.f32.mrf.mxu0
    %v2047 = vadd.f32 %v2006, %v2046
    %v2048 = vpop.f32.mrf.mxu0
    %2049 = vdwg.mxu0
    %v2126 = vunpack.c.l.b16 %v1420
    %v2127 = vunpack.c.h.b16 %v1420
    %v2128 = vunpack.c.l.b16 %v1421
    %v2129 = vunpack.c.l.b16 %v1422
    %v2130 = vunpack.c.h.b16 %v1422
    %v2131 = vunpack.c.l.b16 %v1423
    %v2132 = vunpack.c.l.b16 %v1424
    %v2133 = vunpack.c.h.b16 %v1424
    %v2134 = vunpack.c.l.b16 %v1425
    %v2135 = vunpack.c.l.b16 %v1426
    %v2136 = vunpack.c.h.b16 %v1426
    %v2137 = vunpack.c.l.b16 %v1427
    %v2138 = vunpack.c.l.b16 %v1428
    %v2139 = vunpack.c.h.b16 %v1428
    %v2140 = vunpack.c.l.b16 %v1429
    %v2141 = vunpack.c.l.b16 %v1430
    %v2142 = vunpack.c.h.b16 %v1430
    %v2143 = vunpack.c.l.b16 %v1431
    %v2144 = vunpack.c.l.b16 %v1432
    %v2145 = vunpack.c.h.b16 %v1432
    %v2146 = vunpack.c.l.b16 %v1433
    %v2147 = vunpack.c.l.b16 %v1434
    %v2148 = vunpack.c.h.b16 %v1434
    %v2149 = vunpack.c.l.b16 %v1435
    %v2150 = vunpack.c.l.b16 %v1436
    %v2151 = vunpack.c.h.b16 %v1436
    %v2152 = vunpack.c.l.b16 %v1437
    %v2153 = vunpack.c.l.b16 %v1438
    %v2154 = vunpack.c.h.b16 %v1438
    %v2155 = vunpack.c.l.b16 %v1439
    %v2156 = vunpack.c.l.b16 %v1440
    %v2157 = vunpack.c.h.b16 %v1440
    %v2158 = vunpack.c.l.b16 %v1441
    %v2159 = vunpack.c.l.b16 %v1442
    %v2160 = vunpack.c.h.b16 %v1442
    %v2161 = vunpack.c.l.b16 %v1443
    %v2162 = vunpack.c.l.b16 %v1444
    %v2163 = vunpack.c.h.b16 %v1444
    %v2164 = vunpack.c.l.b16 %v1445
    %v2165 = vunpack.c.l.b16 %v1446
    %v2166 = vunpack.c.h.b16 %v1446
    %v2167 = vunpack.c.l.b16 %v1447
    %v2168 = vunpack.c.l.b16 %v1448
    %v2169 = vunpack.c.h.b16 %v1448
    %v2170 = vunpack.c.l.b16 %v1449
    %v2171 = vunpack.c.l.b16 %v1450
    %v2172 = vunpack.c.h.b16 %v1450
    %v2173 = vunpack.c.l.b16 %v1451
    %v2174 = vunpack.c.l.b16 %v1452
    %v2175 = vunpack.c.h.b16 %v1452
    %v2176 = vunpack.c.l.b16 %v1453
    %v2177 = vunpack.c.l.b16 %v1454
    %v2178 = vunpack.c.h.b16 %v1454
    %v2179 = vunpack.c.l.b16 %v1455
    %v2180 = vunpack.c.l.b16 %v1456
    %v2181 = vunpack.c.h.b16 %v1456
    %v2182 = vunpack.c.l.b16 %v1457
    %v2183 = vunpack.c.l.b16 %v1458
    %v2184 = vunpack.c.h.b16 %v1458
    %v2185 = vunpack.c.l.b16 %v1459
    %v2186 = vunpack.c.l.b16 %v1460
    %v2187 = vunpack.c.h.b16 %v1460
    %v2188 = vunpack.c.l.b16 %v1461
    %v2189 = vunpack.c.l.b16 %v1462
    %v2190 = vunpack.c.h.b16 %v1462
    %v2191 = vunpack.c.l.b16 %v1463
    %v2192 = vunpack.c.l.b16 %v1464
    %v2193 = vunpack.c.h.b16 %v1464
    %v2194 = vunpack.c.l.b16 %v1465
    %v2195 = vunpack.c.l.b16 %v1466
    %v2196 = vunpack.c.h.b16 %v1466
    %v2197 = vunpack.c.l.b16 %v1467
    %v2198 = vunpack.c.l.b16 %v1468
    %v2199 = vunpack.c.h.b16 %v1468
    %v2200 = vunpack.c.l.b16 %v1469
    %v2201 = vunpack.c.l.b16 %v1470
    %v2202 = vunpack.c.h.b16 %v1470
    %v2203 = vunpack.c.l.b16 %v1471
    %v2204 = vunpack.c.l.b16 %v1472
    %v2205 = vunpack.c.h.b16 %v1472
    %v2206 = vunpack.c.l.b16 %v1473
    %v2207 = vunpack.c.l.b16 %v1474
    %v2208 = vunpack.c.h.b16 %v1474
    %v2209 = vunpack.c.l.b16 %v1475
    %v2210 = vunpack.c.l.b16 %v1476
    %v2211 = vunpack.c.h.b16 %v1476
    %v2212 = vunpack.c.l.b16 %v1477
    %v2213 = vunpack.c.l.b16 %v1478
    %v2214 = vunpack.c.h.b16 %v1478
    %v2215 = vunpack.c.l.b16 %v1479
    %v2216 = vunpack.c.l.b16 %v1480
    %v2217 = vunpack.c.h.b16 %v1480
    %v2218 = vunpack.c.l.b16 %v1481
    %v2219 = vunpack.c.l.b16 %v1482
    %v2220 = vunpack.c.h.b16 %v1482
    %v2221 = vunpack.c.l.b16 %v1483
    %v2222 = vunpack.c.l.b16 %v1484
    %v2223 = vunpack.c.h.b16 %v1484
    %v2224 = vunpack.c.l.b16 %v1485
    %v2225 = vunpack.c.l.b16 %v1486
    %v2226 = vunpack.c.h.b16 %v1486
    %v2227 = vunpack.c.l.b16 %v1487
    %v2228 = vunpack.c.l.b16 %v1488
    %v2229 = vunpack.c.h.b16 %v1488
    %v2230 = vunpack.c.l.b16 %v1489
    %v2231 = vunpack.c.l.b16 %v1490
    %v2232 = vunpack.c.h.b16 %v1490
    %v2233 = vunpack.c.l.b16 %v1491
    %v2234 = vunpack.c.l.b16 %v1492
    %v2235 = vunpack.c.h.b16 %v1492
    %v2236 = vunpack.c.l.b16 %v1493
    %v2237 = vunpack.c.l.b16 %v1494
    %v2238 = vunpack.c.h.b16 %v1494
    %v2239 = vunpack.c.l.b16 %v1495
    %v2240 = vpack.c.b16 %v2129, %v2126
    %v2241 = vpack.c.b16 %v2130, %v2127
    %v2242 = vpack.c.b16 %v2131, %v2128
    %v2243 = vpack.c.b16 %v2135, %v2132
    %v2244 = vpack.c.b16 %v2136, %v2133
    %v2245 = vpack.c.b16 %v2137, %v2134
    %v2246 = vpack.c.b16 %v2141, %v2138
    %v2247 = vpack.c.b16 %v2142, %v2139
    %v2248 = vpack.c.b16 %v2143, %v2140
    %v2249 = vpack.c.b16 %v2147, %v2144
    %v2250 = vpack.c.b16 %v2148, %v2145
    %v2251 = vpack.c.b16 %v2149, %v2146
    %v2252 = vpack.c.b16 %v2153, %v2150
    %v2253 = vpack.c.b16 %v2154, %v2151
    %v2254 = vpack.c.b16 %v2155, %v2152
    %v2255 = vpack.c.b16 %v2159, %v2156
    %v2256 = vpack.c.b16 %v2160, %v2157
    %v2257 = vpack.c.b16 %v2161, %v2158
    %v2258 = vpack.c.b16 %v2165, %v2162
    %v2259 = vpack.c.b16 %v2166, %v2163
    %v2260 = vpack.c.b16 %v2167, %v2164
    %v2261 = vpack.c.b16 %v2171, %v2168
    %v2262 = vpack.c.b16 %v2172, %v2169
    %v2263 = vpack.c.b16 %v2173, %v2170
    %v2264 = vpack.c.b16 %v2177, %v2174
    %v2265 = vpack.c.b16 %v2178, %v2175
    %v2266 = vpack.c.b16 %v2179, %v2176
    %v2267 = vpack.c.b16 %v2183, %v2180
    %v2268 = vpack.c.b16 %v2184, %v2181
    %v2269 = vpack.c.b16 %v2185, %v2182
    %v2270 = vpack.c.b16 %v2189, %v2186
    %v2271 = vpack.c.b16 %v2190, %v2187
    %v2272 = vpack.c.b16 %v2191, %v2188
    %v2273 = vpack.c.b16 %v2195, %v2192
    %v2274 = vpack.c.b16 %v2196, %v2193
    %v2275 = vpack.c.b16 %v2197, %v2194
    %v2276 = vpack.c.b16 %v2201, %v2198
    %v2277 = vpack.c.b16 %v2202, %v2199
    %v2278 = vpack.c.b16 %v2203, %v2200
    %v2279 = vpack.c.b16 %v2207, %v2204
    %v2280 = vpack.c.b16 %v2208, %v2205
    %v2281 = vpack.c.b16 %v2209, %v2206
    %v2282 = vpack.c.b16 %v2213, %v2210
    %v2283 = vpack.c.b16 %v2214, %v2211
    %v2284 = vpack.c.b16 %v2215, %v2212
    %v2285 = vpack.c.b16 %v2219, %v2216
    %v2286 = vpack.c.b16 %v2220, %v2217
    %v2287 = vpack.c.b16 %v2221, %v2218
    %v2288 = vpack.c.b16 %v2225, %v2222
    %v2289 = vpack.c.b16 %v2226, %v2223
    %v2290 = vpack.c.b16 %v2227, %v2224
    %v2291 = vpack.c.b16 %v2231, %v2228
    %v2292 = vpack.c.b16 %v2232, %v2229
    %v2293 = vpack.c.b16 %v2233, %v2230
    %v2294 = vpack.c.b16 %v2237, %v2234
    %v2295 = vpack.c.b16 %v2238, %v2235
    %v2296 = vpack.c.b16 %v2239, %v2236
    %v2352 = vsel %vm636, %v173, 0
    %v2355 = vsel %vm640, %v2294, 0
    %v2358 = vsel %vm640, %v2295, 0
    %v2361 = vsel %vm640, %v2296, 0
    %2363 = vmatprep.subr.bf16.mxu0 %v2262
    %2364 = vmatpush1.bf16.msra.mxu0 %v2261
    %2365 = vmatprep.subr.bf16.mxu0 %v2259
    %2366 = vmatpush1.bf16.msra.mxu0 %v2258
    %2367 = vmatprep.subr.bf16.mxu0 %v2256
    %2368 = vmatpush1.bf16.msra.mxu0 %v2255
    %2369 = vmatprep.subr.bf16.mxu0 %v2253
    %2370 = vmatpush1.bf16.msra.mxu0 %v2252
    %2371 = vmatprep.subr.bf16.mxu0 %v2250
    %2372 = vmatpush1.bf16.msra.mxu0 %v2249
    %2373 = vmatprep.subr.bf16.mxu0 %v2247
    %2374 = vmatpush1.bf16.msra.mxu0 %v2246
    %2375 = vmatprep.subr.bf16.mxu0 %v2244
    %2376 = vmatpush1.bf16.msra.mxu0 %v2243
    %2377 = vmatprep.subr.bf16.mxu0 %v2241
    %2378 = vmatpush1.bf16.msra.mxu0 %v2240
    %2379 = vmatprep.subr.bf16.mxu0 %v2286
    %2380 = vmatpush2.bf16.msra.mxu0 %v2285
    %2381 = vmatprep.subr.bf16.mxu0 %v2283
    %2382 = vmatpush2.bf16.msra.mxu0 %v2282
    %2383 = vmatprep.subr.bf16.mxu0 %v2280
    %2384 = vmatpush2.bf16.msra.mxu0 %v2279
    %2385 = vmatprep.subr.bf16.mxu0 %v2277
    %2386 = vmatpush2.bf16.msra.mxu0 %v2276
    %2387 = vmatprep.subr.bf16.mxu0 %v2274
    %2388 = vmatpush2.bf16.msra.mxu0 %v2273
    %2389 = vmatprep.subr.bf16.mxu0 %v2271
    %2390 = vmatpush2.bf16.msra.mxu0 %v2270
    %2391 = vmatprep.subr.bf16.mxu0 %v2268
    %2392 = vmatpush2.bf16.msra.mxu0 %v2267
    %2393 = vmatprep.subr.bf16.mxu0 %v2265
    %2394 = vmatpush2.bf16.msra.mxu0 %v2264
    %2395 = vmatprep.mubr.bf16.mxu0 %v172
    %2396 = vmatmul.mubr.bf16.gmra.mxu0 %v171
    %v2397 = vpop.f32.mrf.mxu0
    %v2398 = vadd.f32 %v1960, %v2397
    %v2399 = vpop.f32.mrf.mxu0
    %v2400 = vadd.f32 %v1962, %v2399
    %v2401 = vpop.f32.mrf.mxu0
    %v2402 = vadd.f32 %v1964, %v2401
    %v2403 = vpop.f32.mrf.mxu0
    %v2404 = vadd.f32 %v1966, %v2403
    %2405 = vdwg.mxu0
    %2406 = vmatprep.subr.bf16.mxu0 0
    %2407 = vmatpush1.bf16.msra.mxu0 0
    %2408 = vmatprep.subr.bf16.mxu0 0
    %2409 = vmatpush1.bf16.msra.mxu0 0
    %2410 = vmatprep.subr.bf16.mxu0 0
    %2411 = vmatpush1.bf16.msra.mxu0 0
    %2412 = vmatprep.subr.bf16.mxu0 0
    %2413 = vmatpush1.bf16.msra.mxu0 0
    %2414 = vmatprep.subr.bf16.mxu0 0
    %2415 = vmatpush1.bf16.msra.mxu0 0
    %2416 = vmatprep.subr.bf16.mxu0 %v2358
    %2417 = vmatpush1.bf16.msra.mxu0 %v2355
    %2418 = vmatprep.subr.bf16.mxu0 %v2292
    %2419 = vmatpush1.bf16.msra.mxu0 %v2291
    %2420 = vmatprep.subr.bf16.mxu0 %v2289
    %2421 = vmatpush1.bf16.msra.mxu0 %v2288
    %2422 = vmatprep.subr.bf16.mxu0 0
    %2423 = vmatpush2.bf16.msra.mxu0 0
    %2424 = vmatprep.subr.bf16.mxu0 0
    %2425 = vmatpush2.bf16.msra.mxu0 0
    %2426 = vmatprep.subr.bf16.mxu0 0
    %2427 = vmatpush2.bf16.msra.mxu0 0
    %2428 = vmatprep.subr.bf16.mxu0 0
    %2429 = vmatpush2.bf16.msra.mxu0 0
    %2430 = vmatprep.subr.bf16.mxu0 0
    %2431 = vmatpush2.bf16.msra.mxu0 0
    %2432 = vmatprep.subr.bf16.mxu0 0
    %2433 = vmatpush2.bf16.msra.mxu0 0
    %2434 = vmatprep.subr.bf16.mxu0 0
    %2435 = vmatpush2.bf16.msra.mxu0 0
    %2436 = vmatprep.subr.bf16.mxu0 0
    %2437 = vmatpush2.bf16.msra.mxu0 0
    %2438 = vmatprep.mubr.bf16.mxu0 0
    %2439 = vmatmul.mubr.bf16.gmra.mxu0 %v2352
    %v2440 = vpop.f32.mrf.mxu0
    %v2441 = vadd.f32 %v2398, %v2440
    %v2442 = vpop.f32.mrf.mxu0
    %v2443 = vadd.f32 %v2400, %v2442
    %v2444 = vpop.f32.mrf.mxu0
    %v2445 = vadd.f32 %v2402, %v2444
    %v2446 = vpop.f32.mrf.mxu0
    %v2447 = vadd.f32 %v2404, %v2446
    %2448 = vdwg.mxu0
    %2449 = vmatprep.subr.bf16.mxu0 0
    %2450 = vmatpush1.bf16.msra.mxu0 %v2263
    %2451 = vmatprep.subr.bf16.mxu0 0
    %2452 = vmatpush1.bf16.msra.mxu0 %v2260
    %2453 = vmatprep.subr.bf16.mxu0 0
    %2454 = vmatpush1.bf16.msra.mxu0 %v2257
    %2455 = vmatprep.subr.bf16.mxu0 0
    %2456 = vmatpush1.bf16.msra.mxu0 %v2254
    %2457 = vmatprep.subr.bf16.mxu0 0
    %2458 = vmatpush1.bf16.msra.mxu0 %v2251
    %2459 = vmatprep.subr.bf16.mxu0 0
    %2460 = vmatpush1.bf16.msra.mxu0 %v2248
    %2461 = vmatprep.subr.bf16.mxu0 0
    %2462 = vmatpush1.bf16.msra.mxu0 %v2245
    %2463 = vmatprep.subr.bf16.mxu0 0
    %2464 = vmatpush1.bf16.msra.mxu0 %v2242
    %2465 = vmatprep.subr.bf16.mxu0 0
    %2466 = vmatpush2.bf16.msra.mxu0 %v2287
    %2467 = vmatprep.subr.bf16.mxu0 0
    %2468 = vmatpush2.bf16.msra.mxu0 %v2284
    %2469 = vmatprep.subr.bf16.mxu0 0
    %2470 = vmatpush2.bf16.msra.mxu0 %v2281
    %2471 = vmatprep.subr.bf16.mxu0 0
    %2472 = vmatpush2.bf16.msra.mxu0 %v2278
    %2473 = vmatprep.subr.bf16.mxu0 0
    %2474 = vmatpush2.bf16.msra.mxu0 %v2275
    %2475 = vmatprep.subr.bf16.mxu0 0
    %2476 = vmatpush2.bf16.msra.mxu0 %v2272
    %2477 = vmatprep.subr.bf16.mxu0 0
    %2478 = vmatpush2.bf16.msra.mxu0 %v2269
    %2479 = vmatprep.subr.bf16.mxu0 0
    %2480 = vmatpush2.bf16.msra.mxu0 %v2266
    %2481 = vmatprep.mubr.bf16.mxu0 %v172
    %2482 = vmatmul.mubr.bf16.gmra.mxu0 %v171
    %v2483 = vpop.f32.mrf.mxu0
    %v2484 = vadd.f32 %v2044, %v2483
    %v2485 = vpop.f32.mrf.mxu0
    %v2486 = vpop.f32.mrf.mxu0
    %v2487 = vadd.f32 %v2047, %v2486
    %v2488 = vpop.f32.mrf.mxu0
    %2489 = vdwg.mxu0
    %2490 = vmatprep.subr.bf16.mxu0 0
    %2491 = vmatpush1.bf16.msra.mxu0 0
    %2492 = vmatprep.subr.bf16.mxu0 0
    %2493 = vmatpush1.bf16.msra.mxu0 0
    %2494 = vmatprep.subr.bf16.mxu0 0
    %2495 = vmatpush1.bf16.msra.mxu0 0
    %2496 = vmatprep.subr.bf16.mxu0 0
    %2497 = vmatpush1.bf16.msra.mxu0 0
    %2498 = vmatprep.subr.bf16.mxu0 0
    %2499 = vmatpush1.bf16.msra.mxu0 0
    %2500 = vmatprep.subr.bf16.mxu0 0
    %2501 = vmatpush1.bf16.msra.mxu0 %v2361
    %2502 = vmatprep.subr.bf16.mxu0 0
    %2503 = vmatpush1.bf16.msra.mxu0 %v2293
    %2504 = vmatprep.subr.bf16.mxu0 0
    %2505 = vmatpush1.bf16.msra.mxu0 %v2290
    %2506 = vmatprep.subr.bf16.mxu0 0
    %2507 = vmatpush2.bf16.msra.mxu0 0
    %2508 = vmatprep.subr.bf16.mxu0 0
    %2509 = vmatpush2.bf16.msra.mxu0 0
    %2510 = vmatprep.subr.bf16.mxu0 0
    %2511 = vmatpush2.bf16.msra.mxu0 0
    %2512 = vmatprep.subr.bf16.mxu0 0
    %2513 = vmatpush2.bf16.msra.mxu0 0
    %2514 = vmatprep.subr.bf16.mxu0 0
    %2515 = vmatpush2.bf16.msra.mxu0 0
    %2516 = vmatprep.subr.bf16.mxu0 0
    %2517 = vmatpush2.bf16.msra.mxu0 0
    %2518 = vmatprep.subr.bf16.mxu0 0
    %2519 = vmatpush2.bf16.msra.mxu0 0
    %2520 = vmatprep.subr.bf16.mxu0 0
    %2521 = vmatpush2.bf16.msra.mxu0 0
    %2522 = vmatprep.mubr.bf16.mxu0 0
    %2523 = vmatmul.mubr.bf16.gmra.mxu0 %v2352
    %v2524 = vpop.f32.mrf.mxu0
    %v2525 = vadd.f32 %v2484, %v2524
    %v2526 = vpop.f32.mrf.mxu0
    %v2527 = vpop.f32.mrf.mxu0
    %v2528 = vadd.f32 %v2487, %v2527
    %v2529 = vpop.f32.mrf.mxu0
    %2530 = vdwg.mxu0
    %v2531 = vld [vmem:[%s9] sm:$0x7]
    %v2533 = vlaneseq
    %v2534 = vshrl.u32 %v2533, 7
    %v2535 = vsub.s32 0, %v2534
    %v2536 = vrot.slane %v2531, %v2535
    %v2537 = vlaneseq
    %v2538 = vshrl.u32 %v2537, 7
    %v2539 = vsub.s32 1, %v2538
    %v2540 = vrot.slane %v2531, %v2539
    %v2541 = vlaneseq
    %v2542 = vshrl.u32 %v2541, 7
    %v2543 = vsub.s32 2, %v2542
    %v2544 = vrot.slane %v2531, %v2543
    %v2548 = vadd.f32 %v2441, %v2536
    %v2549 = vadd.f32 %v2443, %v2540
    %v2550 = vadd.f32 %v2525, %v2544
    %v2551 = vadd.f32 %v2445, %v2536
    %v2552 = vadd.f32 %v2447, %v2540
    %v2553 = vadd.f32 %v2528, %v2544
    %vm2554 = vcmp.gt.f32.partialorder %v2548, 0.0
    %vm2555 = vcmp.gt.f32.partialorder %v2549, 0.0
    %vm2556 = vcmp.gt.f32.partialorder %v2550, 0.0
    %vm2557 = vcmp.gt.f32.partialorder %v2551, 0.0
    %vm2558 = vcmp.gt.f32.partialorder %v2552, 0.0
    %vm2559 = vcmp.gt.f32.partialorder %v2553, 0.0
    %v2560 = vmul.f32 %v2548, 0.01
    %v2561 = vmul.f32 %v2549, 0.01
    %v2562 = vmul.f32 %v2550, 0.01
    %v2563 = vmul.f32 %v2551, 0.01
    %v2564 = vmul.f32 %v2552, 0.01
    %v2565 = vmul.f32 %v2553, 0.01
    %v2566 = vsel %vm2554, %v2548, %v2560
    %v2567 = vsel %vm2555, %v2549, %v2561
    %v2568 = vsel %vm2556, %v2550, %v2562
    %v2569 = vsel %vm2557, %v2551, %v2563
    %v2570 = vsel %vm2558, %v2552, %v2564
    %v2571 = vsel %vm2559, %v2553, %v2565
    %v2572 = vpack.c.bf16 %v2569, %v2566
    %v2573 = vpack.c.bf16 %v2570, %v2567
    %v2574 = vpack.c.bf16 %v2571, %v2568
    %v2578 = vunpack.c.l.b16 %v2572
    %v2579 = vunpack.c.l.b16 %v2573
    %v2580 = vunpack.c.l.b16 %v2574
    %v2581 = vunpack.c.h.b16 %v2572
    %v2582 = vunpack.c.h.b16 %v2573
    %v2583 = vunpack.c.h.b16 %v2574
    %v2584 = vpack.c.b16 %v2579, %v2578
    %v2585 = vpack.c.b16 %v2580, %v2580
    %v2586 = vpack.c.b16 %v2582, %v2581
    %v2587 = vpack.c.b16 %v2583, %v2583
    %2592 = vst [vmem:[#allocation17] sm:$0xff] %v2584
    %2593 = vst.msk [vmem:[#allocation17 + $0x8] sm:$0xf] %vm1361, %v2585
    %2594 = vst [vmem:[#allocation17 + $0xc] sm:$0xff] %v2586
    %2595 = vst.msk [vmem:[#allocation17 + $0x14] sm:$0xf] %vm1361, %v2587
    %v2596 = vld [vmem:[%s10] sm:$0x7]
    %v2598 = vlaneseq
    %v2599 = vshrl.u32 %v2598, 7
    %v2600 = vsub.s32 0, %v2599
    %v2601 = vrot.slane %v2596, %v2600
    %v2602 = vlaneseq
    %v2603 = vshrl.u32 %v2602, 7
    %v2604 = vsub.s32 1, %v2603
    %v2605 = vrot.slane %v2596, %v2604
    %v2606 = vlaneseq
    %v2607 = vshrl.u32 %v2606, 7
    %v2608 = vsub.s32 2, %v2607
    %v2609 = vrot.slane %v2596, %v2608
    %v2613 = vmul.f32 %v2566, %v2601
    %v2614 = vmul.f32 %v2567, %v2605
    %v2615 = vmul.f32 %v2568, %v2609
    %v2616 = vmul.f32 %v2569, %v2601
    %v2617 = vmul.f32 %v2570, %v2605
    %v2618 = vmul.f32 %v2571, %v2609
    %v2619 = vadd.f32 %v2613, %v2614
    %v2620 = vsel %vm636, %v2615, 0.0
    %v2621 = vadd.f32 %v2619, %v2620
    %2622 = vadd.xlane.f32.xlu0 %v2621
    %v2623 = vpop.xlane.xlu0 %2622
    %v2624 = vadd.f32 %v2616, %v2617
    %v2625 = vsel %vm636, %v2618, 0.0
    %v2626 = vadd.f32 %v2624, %v2625
    %2627 = vadd.xlane.f32.xlu0 %v2626
    %v2628 = vpop.xlane.xlu0 %2627
    %s2629 = sld [smem:[#allocation15 + $0x1]]
    %v2630 = vstv %s2629
    %v2631 = vadd.f32 %v2623, %v2630
    %v2632 = vadd.f32 %v2628, %v2630
    %v2635 = vlaneseq
    %v2636 = vshrl.u32 %v2635, 7
    %v2637 = vsub.s32 %v1405, %v2636
    %v2638 = vrot.slane %v2631, %v2637
    %v2639 = vlaneseq
    %v2640 = vshrl.u32 %v2639, 7
    %v2641 = vsub.s32 %v1410, %v2640
    %v2642 = vrot.slane %v2632, %v2641
    %v2643 = vsel %vm1415, %v2642, %v2638
    %2645 = vst.msk [vmem:[%s13] sm:$0x1] %vm1418, %v2643
    // Predicated region
    $region82: #{pre_predictions.1} parent=1 // pred_check
      _
    $region83: #{pre_predictions.1} parent=1 // pred_check_branch
      %2647 = sbr.rel (0) target = $region85
    $region84: #{pre_predictions.1} parent=1 // pred_region
      _
    $region85: #{pre_predictions.1} parent=1 // pred_fallthru
      _
    // Predicated region
    $region86: #{pre_predictions.1} parent=1 // pred_check
      _
    $region87: #{pre_predictions.1} parent=1 // pred_check_branch
      %2649 = sbr.rel (0) target = $region89
    $region88: #{pre_predictions.1} parent=1 // pred_region
      _
    $region89: #{pre_predictions.1} parent=1 // pred_fallthru
      _
    // Predicated region
    $region90: #{pre_predictions.1} parent=1 // pred_check
      _
    $region91: #{pre_predictions.1} parent=1 // pred_check_branch
      %2651 = sbr.rel (0) target = $region93
    $region92: #{pre_predictions.1} parent=1 // pred_region
      %s2653 = ssub.s32 384, 384
      %2654 = vsyncadd [#allocation4], %s2653
      %s2655 = sshll.u32 [#allocation16], 4
      %s2656 = int_to_ptr.vmem [resolvable:$true] %s2655
      %2661 = dma.vmem_to_hbm [thread:$0]  %s2656, 384, %s14, [#allocation4], 192, 192, 12
    $region93: #{pre_predictions.1} parent=1 // pred_fallthru
      _
    // Predicated region
    $region94: #{pre_predictions.1} parent=1 // pred_check
      _
    $region95: #{pre_predictions.1} parent=1 // pred_check_branch
      %2663 = sbr.rel (0) target = $region97
    $region96: #{pre_predictions.1} parent=1 // pred_region
      %s2665 = ssub.s32 384, 384
      %2666 = vsyncadd [#allocation18], %s2665
      %s2667 = sshll.u32 [#allocation17], 4
      %s2668 = int_to_ptr.vmem [resolvable:$true] %s2667
      %2673 = dma.vmem_to_hbm [thread:$0]  %s2668, 384, %s15, [#allocation18], 192, 192, 12
    $region97: #{pre_predictions.1} parent=1 // pred_fallthru
      _
    // Predicated region
    $region98: #{pre_predictions.1} parent=1 // pred_check
      _
    $region99: #{pre_predictions.1} parent=1 // pred_check_branch
      %2675 = sbr.rel (0) target = $region101
    $region100: #{pre_predictions.1} parent=1 // pred_region
      _
    $region101: #{pre_predictions.1} parent=1 // pred_fallthru
      _
    // Predicated region
    $region102: #{pre_predictions.1} parent=1 // pred_check
      _
    $region103: #{pre_predictions.1} parent=1 // pred_check_branch
      %2677 = sbr.rel (0) target = $region105
    $region104: #{pre_predictions.1} parent=1 // pred_region
      _
    $region105: #{pre_predictions.1} parent=1 // pred_fallthru
      _
    // Predicated region
    $region106: #{pre_predictions.1} parent=1 // pred_check
      _
    $region107: #{pre_predictions.1} parent=1 // pred_check_branch
      %2679 = sbr.rel (0) target = $region109
    $region108: #{pre_predictions.1} parent=1 // pred_region
      %2680 = dma.done [#allocation4], 384
    $region109: #{pre_predictions.1} parent=1 // pred_fallthru
      _
    // Predicated region
    $region110: #{pre_predictions.1} parent=1 // pred_check
      _
    $region111: #{pre_predictions.1} parent=1 // pred_check_branch
      %2682 = sbr.rel (0) target = $region113
    $region112: #{pre_predictions.1} parent=1 // pred_region
      %2683 = dma.done [#allocation18], 384
    $region113: #{pre_predictions.1} parent=1 // pred_fallthru
      _
    %2684 = vsyncpa [#allocation3], 1
    %2685 = vsyncpa [#allocation7], 1
    %2686 = vsyncpa [#allocation10], 1
    %2687 = vsyncpa [#allocation13], 1
    %2688 = vsyncpa [#allocation4], 1
    %2689 = vsyncpa [#allocation18], 1
    %2690 = vsyncpa [#allocation5], 1

</llo_original>
